<compile_context>
chip_gen: v5e
topology: v5e:2x2
jax: 0.10.0
libtpu: 0.0.40
codegen_flags: <defaults>
</compile_context>

<pallas_src>
import functools

import jax
import jax.numpy as jnp
from jax.experimental import pallas as pl
from jax.experimental.pallas import tpu as pltpu


# ----------------------------- fused Pallas kernel -----------------------------


def _fused_kernel(x_ref, valid_ref, edge_ref, e_ref, o_ref, *, c2, hw, fuse,
                  softmax_scale, inv_area):
    """Per-batch fused score -> fuse -> mask -> softmax -> paste.

    x_ref:     (1, 2*c2, hw)  features, channels on sublanes / hw on lanes
    valid_ref: (1, hw)        1.0 for usable latter patches, 0.0 inside the hole
    edge_ref:  (2, hw)        row 0: [0,1,..,1]  (idx >= 1), row 1: [1,..,1,0] (idx <= hw-2)
    e_ref:     (hw, hw)       bf16 column-major predecessor 0/1 shift matrix E
    o_ref:     (1, 3*c2, hw)  [former | latter | shift]
    """
    bf16 = jnp.bfloat16
    f32 = jnp.float32

    # former|latter passthrough: single contiguous lane-dense store.
    o_ref[0, :2 * c2, :] = x_ref[0, :, :]

    f = x_ref[0, :c2, :].astype(f32)                       # (c2, hw)
    l = x_ref[0, c2:, :].astype(f32)                       # (c2, hw)
    valid = valid_ref[...]                                 # (1, hw)

    # --- L2-normalize latter patches (columns) --------------------------------
    ssum = jnp.sum(l * l, axis=0, keepdims=True)           # (1, hw) sublane reduce
    ln = l * (1.0 / jnp.maximum(jnp.sqrt(ssum), 1e-4))     # (c2, hw)

    # --- build "fuse-absorbed" feature stacks ----------------------------------
    # fuse pass 1 (row-major flat diagonal) is a column-shift of F / Ln;
    # fuse pass 2 (column-major flat diagonal) is a column-permutation by E.
    if fuse:
        lo = edge_ref[0:1, :]                              # zero at lane 0
        hi = edge_ref[1:2, :]                              # zero at lane hw-1
        eb = e_ref[...]                                    # (hw, hw) bf16

        def stack3(a):                                     # (c2,hw) -> (3*c2,hw)
            a_prev = pltpu.roll(a, 1, axis=1) * lo         # a[:, p-1], 0 at p=0
            a_next = pltpu.roll(a, hw - 1, axis=1) * hi    # a[:, p+1], 0 at p=hw-1
            return jnp.concatenate([a, a_prev, a_next], axis=0)

        def stack_cm(a):                                   # (3*c2,hw) bf16 -> (9*c2,hw)
            a_prev = jax.lax.dot_general(a, eb, (((1,), (1,)), ((), ())),
                                         preferred_element_type=f32)   # a @ E^T
            a_next = jax.lax.dot_general(a, eb, (((1,), (0,)), ((), ())),
                                         preferred_element_type=f32)   # a @ E
            return jnp.concatenate(
                [a, a_prev.astype(bf16), a_next.astype(bf16)], axis=0)

        big_f = stack_cm(stack3(f).astype(bf16))           # (9*c2, hw) bf16
        big_l = stack_cm(stack3(ln).astype(bf16))          # (9*c2, hw) bf16
    else:
        big_f = f.astype(bf16)
        big_l = ln.astype(bf16)

    # --- fused cosine scores in ONE matmul (contraction 9*c2), f32 accumulate ---
    s = jax.lax.dot_general(big_f, big_l, (((0,), (0,)), ((), ())),
                            preferred_element_type=f32)    # (hw, hw)

    # --- pre-softmax mask (folded with scale) + numerically-stable exp ----------
    z = s * (valid * softmax_scale)                        # (hw, hw) * (1, hw)
    m = jnp.max(z, axis=-1, keepdims=True)                 # (hw, 1)
    # NOTE: exp kept in f32 so the same kernel is optimal on v5e (no bf16 VPU/EUP);
    # on v6e/v7x casting (z - m) to bf16 before exp halves this stage.
    p_exp = jnp.exp(z - m)                                 # (hw, hw) f32

    # --- paste + deferred softmax normalization + post-softmax mask -------------
    # One matmul produces both the (post-softmax-masked) numerator and, via an
    # appended ones row, the softmax denominator as a lane-dense (1, hw) row.
    ones_blk = jnp.ones((8, hw), f32)                      # row 0 used, rest padding
    l_aug = jnp.concatenate([l * valid, ones_blk], axis=0).astype(bf16)  # (c2+8, hw)
    out_aug = jax.lax.dot_general(l_aug, p_exp.astype(bf16),
                                  (((1,), (1,)), ((), ())),
                                  preferred_element_type=f32)            # (c2+8, hw)
    denom = out_aug[c2:c2 + 1, :]                          # (1, hw), >= 1 always
    shift = out_aug[:c2, :] * pl.reciprocal(denom, approx=True)
    if inv_area != 1.0:
        shift = shift * inv_area
    o_ref[0, 2 * c2:, :] = shift.astype(o_ref.dtype)


def _fused_call(x_flat, valid, edge, e_mat, *, c2, fuse, softmax_scale, inv_area):
    b, c, hw = x_flat.shape
    kernel = functools.partial(_fused_kernel, c2=c2, hw=hw, fuse=fuse,
                               softmax_scale=float(softmax_scale),
                               inv_area=float(inv_area))
    return pl.pallas_call(
        kernel,
        out_shape=jax.ShapeDtypeStruct((b, 3 * c2, hw), x_flat.dtype),
        grid_spec=pltpu.PrefetchScalarGridSpec(
            num_scalar_prefetch=0,
            grid=(b,),                                   # b>=2 keeps both v7x TCs busy
            in_specs=[
                pl.BlockSpec((1, c, hw), lambda i: (i, 0, 0)),
                pl.BlockSpec((1, hw), lambda i: (0, 0)),       # shared validity row
                pl.BlockSpec((2, hw), lambda i: (0, 0)),       # shared edge masks
                pl.BlockSpec((hw, hw), lambda i: (0, 0)),      # shared shift matrix E
            ],
            out_specs=pl.BlockSpec((1, 3 * c2, hw), lambda i: (i, 0, 0)),
        ),
        compiler_params=pltpu.CompilerParams(dimension_semantics=("parallel",)),
    )(x_flat, valid, edge, e_mat)


# ---------------------------------- JAX glue ----------------------------------


def _cal_flag(mask, shift_sz, stride, mask_thred):
    """Per-patch masked indicator (1 = patch lies in the hole), cf. util.cal_flag_given_mask_thred."""
    pad = shift_sz // 2
    m = jnp.pad(mask.astype(jnp.float32), ((0, 0), (0, 0), (pad, pad), (pad, pad)))
    k = jnp.ones((1, 1, shift_sz, shift_sz), jnp.float32)
    sums = jax.lax.conv_general_dilated(
        m, k, (stride, stride), "VALID",
        dimension_numbers=("NCHW", "OIHW", "NCHW"))
    masked = (sums >= mask_thred).astype(jnp.float32)
    return masked.reshape(-1)                              # (hw,)


@functools.partial(jax.jit, static_argnames=("shift_sz", "stride", "mask_thred",
                                             "fuse", "softmax_scale"))
def patch_soft_shift_forward(x, mask, *, shift_sz=1, stride=1, mask_thred=1,
                             fuse=True, softmax_scale=10.0):
    b, c, h, w = x.shape
    c2 = c // 2
    hw = h * w

    x_flat = x.reshape(b, c, hw)                           # free (contiguous)

    # NOTE: mask is shared across the batch (batch-1 feature mask), matching the module.
    masked = _cal_flag(mask, shift_sz, stride, mask_thred)            # (hw,) 1 = hole
    valid = (1.0 - masked).reshape(1, hw).astype(jnp.float32)

    # Tiny precomputed edge masks for the fuse's flat-index boundaries.
    idx = jnp.arange(hw)
    edge = jnp.stack([(idx >= 1), (idx <= hw - 2)]).astype(jnp.float32)  # (2, hw)

    # Column-major predecessor 0/1 matrix for the fuse's cross-major pass:
    # E[p, q] = 1 iff colmajor(q) == colmajor(p) - 1 (row-major p = y*w + x).
    pidx = jnp.arange(hw, dtype=jnp.int32)
    cm = (pidx % w) * h + (pidx // w)
    e_mat = (cm[:, None] == cm[None, :] + 1).astype(jnp.bfloat16)

    out_flat = _fused_call(x_flat, valid, edge, e_mat, c2=c2, fuse=fuse,
                           softmax_scale=softmax_scale,
                           inv_area=1.0 / float(shift_sz * shift_sz))
    return out_flat.reshape(b, 3 * c2, h, w)               # free (contiguous)


class InnerPatchSoftShiftTriple:
    """JAX/Pallas port of the PyTorch InnerPatchSoftShiftTriple module."""

    def __init__(self, shift_sz=1, stride=1, mask_thred=1, triple_weight=1,
                 fuse=True, layer_to_last=3):
        # TODO(synk): paste (conv_transpose2d) step is specialized to shift_sz=1 / stride=1
        # (the module defaults); larger patch sizes would need a col2im scatter-add.
        assert shift_sz == 1 and stride == 1, "kernel specialized for shift_sz=1, stride=1"
        self.shift_sz = shift_sz
        self.stride = stride
        self.mask_thred = mask_thred
        self.triple_weight = triple_weight   # unused in forward (kept for parity)
        self.fuse = fuse
        self.layer_to_last = layer_to_last
        self.mask = None

    def set_mask(self, mask_feat):
        # Original calls util.cal_feat_mask(mask_global, layer_to_last) to downsample
        # the global mask; here we accept the feature-resolution (1,1,h,w) mask directly.
        self.mask = mask_feat
        return self.mask

    def __call__(self, x):
        assert self.mask is not None, "call set_mask(...) first"
        return patch_soft_shift_forward(
            x, self.mask,
            shift_sz=self.shift_sz, stride=self.stride, mask_thred=self.mask_thred,
            fuse=self.fuse, softmax_scale=10.0)


if __name__ == "__main__":
    key = jax.random.PRNGKey(0)
    b, c, h, w = 2, 64, 16, 16        # c must be even; hw = 256 (lane-dense)

    x = jax.random.normal(key, (b, c, h, w), dtype=jnp.float32)

    # Deterministic feature-level binary mask: centered square hole (1 = hole).
    mask = jnp.zeros((1, 1, h, w), jnp.float32)
    mask = mask.at[:, :, 4:12, 4:12].set(1.0)

    layer = InnerPatchSoftShiftTriple(shift_sz=1, stride=1, mask_thred=1,
                                      triple_weight=1, fuse=True, layer_to_last=3)
    layer.set_mask(mask)

    out = layer(x)
    out = jax.block_until_ready(out)

    assert out.shape == (b, (c // 2) * 3, h, w), out.shape
    assert bool(jnp.all(jnp.isfinite(out)))
    # former / latter passthrough sanity check
    assert bool(jnp.allclose(out[:, : c // 2], x[:, : c // 2]))
    assert bool(jnp.allclose(out[:, c // 2: c], x[:, c // 2:]))

    print("KERNEL_OK")
</pallas_src>

<mosaic_0001>
module attributes {stable_mosaic.version = 11 : i64} {
  func.func @_fused_kernel(%arg0: i32, %arg1: memref<1x64x256xf32, #tpu.memory_space<vmem>>, %arg2: memref<1x256xf32, #tpu.memory_space<vmem>>, %arg3: memref<2x256xf32, #tpu.memory_space<vmem>>, %arg4: memref<256x256xbf16, #tpu.memory_space<vmem>>, %arg5: memref<1x96x256xf32, #tpu.memory_space<vmem>>) attributes {dimension_semantics = [#tpu.dimension_semantics<parallel>], iteration_bounds = array<i64: 2>, scalar_prefetch = 0 : i64, scratch_operands = 0 : i64, tpu.core_type = #tpu.core_type<tc>, window_params = [{transform_indices = @transform_0, window_bounds = array<i64: 1, 64, 256>}, {pipeline_mode = #tpu.pipeline_mode<synchronous>, transform_indices = @transform_1, window_bounds = array<i64: 1, 256>}, {pipeline_mode = #tpu.pipeline_mode<synchronous>, transform_indices = @transform_2, window_bounds = array<i64: 2, 256>}, {pipeline_mode = #tpu.pipeline_mode<synchronous>, transform_indices = @transform_3, window_bounds = array<i64: 256, 256>}, {transform_indices = @transform_4, window_bounds = array<i64: 1, 96, 256>}]} {
    %c0 = arith.constant 0 : index
    %c0_0 = arith.constant 0 : index
    %c0_1 = arith.constant 0 : index
    %0 = vector.load %arg1[%c0, %c0_0, %c0_1] : memref<1x64x256xf32, #tpu.memory_space<vmem>>, vector<1x64x256xf32>
    %1 = vector.shape_cast %0 : vector<1x64x256xf32> to vector<64x256xf32>
    %c0_2 = arith.constant 0 : index
    %c0_3 = arith.constant 0 : index
    %c0_4 = arith.constant 0 : index
    %2 = vector.load %arg5[%c0_2, %c0_3, %c0_4] : memref<1x96x256xf32, #tpu.memory_space<vmem>>, vector<1x64x256xf32>
    %3 = vector.shape_cast %2 : vector<1x64x256xf32> to vector<64x256xf32>
    %4 = vector.shape_cast %1 : vector<64x256xf32> to vector<1x64x256xf32>
    tpu.vector_store %arg5[%c0_2, %c0_3, %c0_4], %4 {strides = array<i32>} : memref<1x96x256xf32, #tpu.memory_space<vmem>>, vector<1x64x256xf32>,
    %c0_5 = arith.constant 0 : index
    %c0_6 = arith.constant 0 : index
    %c0_7 = arith.constant 0 : index
    %5 = vector.load %arg1[%c0_5, %c0_6, %c0_7] : memref<1x64x256xf32, #tpu.memory_space<vmem>>, vector<1x32x256xf32>
    %6 = vector.shape_cast %5 : vector<1x32x256xf32> to vector<32x256xf32>
    %c0_8 = arith.constant 0 : index
    %c32 = arith.constant 32 : index
    %c0_9 = arith.constant 0 : index
    %7 = vector.load %arg1[%c0_8, %c32, %c0_9] : memref<1x64x256xf32, #tpu.memory_space<vmem>>, vector<1x32x256xf32>
    %8 = vector.shape_cast %7 : vector<1x32x256xf32> to vector<32x256xf32>
    %c0_10 = arith.constant 0 : index
    %c0_11 = arith.constant 0 : index
    %9 = vector.load %arg2[%c0_10, %c0_11] : memref<1x256xf32, #tpu.memory_space<vmem>>, vector<1x256xf32>
    %10 = arith.mulf %8, %8 : vector<32x256xf32>
    %cst = arith.constant dense<0.000000e+00> : vector<256xf32>
    %11 = vector.multi_reduction <add>, %10, %cst [0] : vector<32x256xf32> to vector<256xf32>
    %12 = vector.shape_cast %11 : vector<256xf32> to vector<1x256xf32>
    %13 = math.sqrt %12 : vector<1x256xf32>
    %cst_12 = arith.constant 9.99999974E-5 : f32
    %14 = vector.broadcast %cst_12 : f32 to vector<1x256xf32>
    %15 = arith.maximumf %13, %14 : vector<1x256xf32>
    %cst_13 = arith.constant 1.000000e+00 : f32
    %16 = vector.broadcast %cst_13 : f32 to vector<1x256xf32>
    %17 = arith.divf %16, %15 : vector<1x256xf32>
    %18 = vector.broadcast %17 : vector<1x256xf32> to vector<32x256xf32>
    %19 = arith.mulf %8, %18 : vector<32x256xf32>
    %c0_14 = arith.constant 0 : index
    %c0_15 = arith.constant 0 : index
    %20 = vector.load %arg3[%c0_14, %c0_15] : memref<2x256xf32, #tpu.memory_space<vmem>>, vector<1x256xf32>
    %c1 = arith.constant 1 : index
    %c0_16 = arith.constant 0 : index
    %21 = vector.load %arg3[%c1, %c0_16] : memref<2x256xf32, #tpu.memory_space<vmem>>, vector<1x256xf32>
    %c0_17 = arith.constant 0 : index
    %c0_18 = arith.constant 0 : index
    %22 = vector.load %arg4[%c0_17, %c0_18] : memref<256x256xbf16, #tpu.memory_space<vmem>>, vector<256x256xbf16>
    %c1_i32 = arith.constant 1 : i32
    %23 = tpu.dynamic_rotate %6 by %c1_i32 dim 1 : vector<32x256xf32>, i32 -> vector<32x256xf32>
    %24 = vector.broadcast %20 : vector<1x256xf32> to vector<32x256xf32>
    %25 = arith.mulf %23, %24 : vector<32x256xf32>
    %c255_i32 = arith.constant 255 : i32
    %26 = tpu.dynamic_rotate %6 by %c255_i32 dim 1 : vector<32x256xf32>, i32 -> vector<32x256xf32>
    %27 = vector.broadcast %21 : vector<1x256xf32> to vector<32x256xf32>
    %28 = arith.mulf %26, %27 : vector<32x256xf32>
    %29 = tpu.concatenate %6, %25, %28 in 0 : vector<32x256xf32>, vector<32x256xf32>, vector<32x256xf32> -> vector<96x256xf32>
    %30 = arith.truncf %29 : vector<96x256xf32> to vector<96x256xbf16>
    %cst_19 = arith.constant dense<0.000000e+00> : vector<96x256xf32>
    %31 = tpu.matmul %30, %22, %cst_19 {dimension_numbers = #tpu.dot_dimension_numbers<[1], [1], [0], [0], [0, 0, 1, 0], [], []>} : vector<96x256xbf16>, vector<256x256xbf16>, vector<96x256xf32> -> vector<96x256xf32>
    %cst_20 = arith.constant dense<0.000000e+00> : vector<96x256xf32>
    %32 = tpu.matmul %30, %22, %cst_20 {dimension_numbers = #tpu.dot_dimension_numbers<[1], [0], [0], [1], [0, 0, 1, 1], [], []>} : vector<96x256xbf16>, vector<256x256xbf16>, vector<96x256xf32> -> vector<96x256xf32>
    %33 = arith.truncf %31 : vector<96x256xf32> to vector<96x256xbf16>
    %34 = arith.truncf %32 : vector<96x256xf32> to vector<96x256xbf16>
    %35 = tpu.concatenate %30, %33, %34 in 0 : vector<96x256xbf16>, vector<96x256xbf16>, vector<96x256xbf16> -> vector<288x256xbf16>
    %c1_i32_21 = arith.constant 1 : i32
    %36 = tpu.dynamic_rotate %19 by %c1_i32_21 dim 1 : vector<32x256xf32>, i32 -> vector<32x256xf32>
    %37 = vector.broadcast %20 : vector<1x256xf32> to vector<32x256xf32>
    %38 = arith.mulf %36, %37 : vector<32x256xf32>
    %c255_i32_22 = arith.constant 255 : i32
    %39 = tpu.dynamic_rotate %19 by %c255_i32_22 dim 1 : vector<32x256xf32>, i32 -> vector<32x256xf32>
    %40 = vector.broadcast %21 : vector<1x256xf32> to vector<32x256xf32>
    %41 = arith.mulf %39, %40 : vector<32x256xf32>
    %42 = tpu.concatenate %19, %38, %41 in 0 : vector<32x256xf32>, vector<32x256xf32>, vector<32x256xf32> -> vector<96x256xf32>
    %43 = arith.truncf %42 : vector<96x256xf32> to vector<96x256xbf16>
    %cst_23 = arith.constant dense<0.000000e+00> : vector<96x256xf32>
    %44 = tpu.matmul %43, %22, %cst_23 {dimension_numbers = #tpu.dot_dimension_numbers<[1], [1], [0], [0], [0, 0, 1, 0], [], []>} : vector<96x256xbf16>, vector<256x256xbf16>, vector<96x256xf32> -> vector<96x256xf32>
    %cst_24 = arith.constant dense<0.000000e+00> : vector<96x256xf32>
    %45 = tpu.matmul %43, %22, %cst_24 {dimension_numbers = #tpu.dot_dimension_numbers<[1], [0], [0], [1], [0, 0, 1, 1], [], []>} : vector<96x256xbf16>, vector<256x256xbf16>, vector<96x256xf32> -> vector<96x256xf32>
    %46 = arith.truncf %44 : vector<96x256xf32> to vector<96x256xbf16>
    %47 = arith.truncf %45 : vector<96x256xf32> to vector<96x256xbf16>
    %48 = tpu.concatenate %43, %46, %47 in 0 : vector<96x256xbf16>, vector<96x256xbf16>, vector<96x256xbf16> -> vector<288x256xbf16>
    %cst_25 = arith.constant dense<0.000000e+00> : vector<256x256xf32>
    %49 = tpu.matmul %35, %48, %cst_25 {dimension_numbers = #tpu.dot_dimension_numbers<[0], [0], [1], [1], [0, 1, 1, 1], [], []>} : vector<288x256xbf16>, vector<288x256xbf16>, vector<256x256xf32> -> vector<256x256xf32>
    %cst_26 = arith.constant 1.000000e+01 : f32
    %50 = vector.broadcast %cst_26 : f32 to vector<1x256xf32>
    %51 = arith.mulf %9, %50 : vector<1x256xf32>
    %52 = vector.broadcast %51 : vector<1x256xf32> to vector<256x256xf32>
    %53 = arith.mulf %49, %52 : vector<256x256xf32>
    %cst_27 = arith.constant dense<0xFF800000> : vector<256xf32>
    %54 = vector.multi_reduction <maximumf>, %53, %cst_27 [1] : vector<256x256xf32> to vector<256xf32>
    %55 = vector.shape_cast %54 : vector<256xf32> to vector<256x1xf32>
    %56 = vector.broadcast %55 : vector<256x1xf32> to vector<256x256xf32>
    %57 = arith.subf %53, %56 : vector<256x256xf32>
    %58 = math.exp %57 : vector<256x256xf32>
    %cst_28 = arith.constant 1.000000e+00 : f32
    %59 = vector.broadcast %cst_28 : f32 to vector<8x256xf32>
    %60 = vector.broadcast %9 : vector<1x256xf32> to vector<32x256xf32>
    %61 = arith.mulf %8, %60 : vector<32x256xf32>
    %62 = tpu.concatenate %61, %59 in 0 : vector<32x256xf32>, vector<8x256xf32> -> vector<40x256xf32>
    %63 = arith.truncf %62 : vector<40x256xf32> to vector<40x256xbf16>
    %64 = arith.truncf %58 : vector<256x256xf32> to vector<256x256xbf16>
    %cst_29 = arith.constant dense<0.000000e+00> : vector<40x256xf32>
    %65 = tpu.matmul %63, %64, %cst_29 {dimension_numbers = #tpu.dot_dimension_numbers<[1], [1], [0], [0], [0, 0, 1, 0], [], []>} : vector<40x256xbf16>, vector<256x256xbf16>, vector<40x256xf32> -> vector<40x256xf32>
    %66 = vector.extract_strided_slice %65 {offsets = [32, 0], sizes = [1, 256], strides = [1, 1]} : vector<40x256xf32> to vector<1x256xf32>
    %67 = vector.extract_strided_slice %65 {offsets = [0, 0], sizes = [32, 256], strides = [1, 1]} : vector<40x256xf32> to vector<32x256xf32>
    %68 = tpu.reciprocal %66 {approx = true} : vector<1x256xf32> -> vector<1x256xf32>
    %69 = vector.broadcast %68 : vector<1x256xf32> to vector<32x256xf32>
    %70 = arith.mulf %67, %69 : vector<32x256xf32>
    %c0_30 = arith.constant 0 : index
    %c64 = arith.constant 64 : index
    %c0_31 = arith.constant 0 : index
    %71 = vector.load %arg5[%c0_30, %c64, %c0_31] : memref<1x96x256xf32, #tpu.memory_space<vmem>>, vector<1x32x256xf32>
    %72 = vector.shape_cast %71 : vector<1x32x256xf32> to vector<32x256xf32>
    %73 = vector.shape_cast %70 : vector<32x256xf32> to vector<1x32x256xf32>
    tpu.vector_store %arg5[%c0_30, %c64, %c0_31], %73 {strides = array<i32>} : memref<1x96x256xf32, #tpu.memory_space<vmem>>, vector<1x32x256xf32>,
    return
  }
  func.func @transform_0(%arg0: i32) -> (i32, i32, i32) {
    %c0_i32 = arith.constant 0 : i32
    %c0_i32_0 = arith.constant 0 : i32
    %c0_i32_1 = arith.constant 0 : i32
    return %arg0, %c0_i32, %c0_i32_0 : i32, i32, i32
  }
  func.func @transform_1(%arg0: i32) -> (i32, i32) {
    %c0_i32 = arith.constant 0 : i32
    %c0_i32_0 = arith.constant 0 : i32
    %c0_i32_1 = arith.constant 0 : i32
    return %c0_i32, %c0_i32_0 : i32, i32
  }
  func.func @transform_2(%arg0: i32) -> (i32, i32) {
    %c0_i32 = arith.constant 0 : i32
    %c0_i32_0 = arith.constant 0 : i32
    %c0_i32_1 = arith.constant 0 : i32
    return %c0_i32, %c0_i32_0 : i32, i32
  }
  func.func @transform_3(%arg0: i32) -> (i32, i32) {
    %c0_i32 = arith.constant 0 : i32
    %c0_i32_0 = arith.constant 0 : i32
    %c0_i32_1 = arith.constant 0 : i32
    return %c0_i32, %c0_i32_0 : i32, i32
  }
  func.func @transform_4(%arg0: i32) -> (i32, i32, i32) {
    %c0_i32 = arith.constant 0 : i32
    %c0_i32_0 = arith.constant 0 : i32
    %c0_i32_1 = arith.constant 0 : i32
    return %arg0, %c0_i32, %c0_i32_0 : i32, i32, i32
  }
}

</mosaic_0001>

<llo_original>
// kernel: patch_soft_shift_forward.1
$region0: #{patch_soft_shift_forward.1}
  #allocation0 [shape = 'u32[]', space=smem, size = 0x4, offset = 0x4, fixed_abs, tag = 'smem constant byte address 0x4 - core index']
  #allocation1 [shape = 'u32[72,128]{1,0:T(1,128)}', space=vmem, size = 0x9000, scoped, tag = 'internal scratch']
  %s0 = inlined_call_operand.vmem [shape: f32[2,64,256], index: 0, kind: input, shape index: {}]
  %s1 = inlined_call_operand.vmem [shape: f32[1,256], index: 1, kind: input, shape index: {}]
  %s2 = inlined_call_operand.vmem [shape: f32[2,256], index: 2, kind: input, shape index: {}]
  %s3 = inlined_call_operand.vmem [shape: bf16[256,256], index: 3, kind: input, shape index: {}]
  %s4 = inlined_call_operand.vmem [shape: f32[2,96,256], index: 4, kind: output, shape index: {}]
  %s5 = sld [smem:[#allocation0]]
  $region49: #{patch_soft_shift_forward.1} parent=0
    _
  %s7 = ssub.s32 1, %s5
  %s8 = scalar_select 0, %s7, %s5
  loop: start=0, step=1, limit=4
  $region2: #{patch_soft_shift_forward.1} parent=0 // loop_pre_header
    _
  $region3: #{patch_soft_shift_forward.1} parent=0 // loop_header
    %s10 = sphi 0, %s14
    %p11 = scmp.ge.s32.totalorder %s10, 4
    %s20 = sphi 0, %s22
    %s23 = sphi 0, %s20
    %s24 = sphi 0, %s23
    %s40 = sphi 0, %s24
    %s44 = sphi 0, %s44
    %s46 = sphi 0, %s44
    %s47 = sphi 0, %s46
    %s61 = sphi 0, %s47
    %s65 = sphi 0, %s65
    %s67 = sphi 0, %s65
    %s68 = sphi 0, %s67
    %s82 = sphi 0, %s68
    %s86 = sphi 0, %s86
    %s88 = sphi 0, %s86
    %s89 = sphi 0, %s88
    %s103 = sphi 0, %s89
    %s109 = sphi 0, %s111
    %s112 = sphi 0, %s109
    %s113 = sphi 0, %s112
    %s129 = sphi 0, %s113
  $region4: #{patch_soft_shift_forward.1} parent=0 // loop_header_branch
    %13 = sbr.rel (%p11) target = $region8
  $region5: #{patch_soft_shift_forward.1} parent=0 // loop_body
    %s15 = ssub.s32 %s10, 1
    %s16 = ssub.s32 %s10, 2
    %s17 = sadd.s32 %s10, 1
    %s18 = ssub.s32 %s10, %s17
    %p19 = scmp.eq.s32.totalorder %s18, 0
    %s21 = sadd.s32 %s20, 1
    %s22 = scalar_select %p19, %s20, %s21
    %p25 = pneg %p19
    %p26 = scmp.eq.s32.totalorder %s10, 1
    %p27 = por %p25, %p26
    %p28 = scmp.ne.s32.totalorder %s20, %s23
    %p29 = scmp.eq.s32.totalorder %s10, 0
    %p30 = por %p28, %p29
    %p31 = scmp.ne.s32.totalorder %s20, %s23
    %p32 = scmp.eq.s32.totalorder %s15, 1
    %p33 = por %p31, %p32
    %p34 = scmp.ne.s32.totalorder %s23, %s24
    %p35 = scmp.eq.s32.totalorder %s15, 0
    %p36 = por %p34, %p35
    %p37 = scmp.ne.s32.totalorder %s23, %s24
    %p38 = scmp.eq.s32.totalorder %s16, 1
    %p39 = por %p37, %p38
    %p41 = scmp.ne.s32.totalorder %s24, %s40
    %p42 = scmp.eq.s32.totalorder %s16, 0
    %p43 = por %p41, %p42
    %s45 = sadd.s32 %s44, 1
    %p48 = scmp.eq.s32.totalorder %s10, 1
    %p49 = scmp.ne.s32.totalorder %s44, %s46
    %p50 = scmp.eq.s32.totalorder %s10, 0
    %p51 = por %p49, %p50
    %p52 = scmp.ne.s32.totalorder %s44, %s46
    %p53 = scmp.eq.s32.totalorder %s15, 1
    %p54 = por %p52, %p53
    %p55 = scmp.ne.s32.totalorder %s46, %s47
    %p56 = scmp.eq.s32.totalorder %s15, 0
    %p57 = por %p55, %p56
    %p58 = scmp.ne.s32.totalorder %s46, %s47
    %p59 = scmp.eq.s32.totalorder %s16, 1
    %p60 = por %p58, %p59
    %p62 = scmp.ne.s32.totalorder %s47, %s61
    %p63 = scmp.eq.s32.totalorder %s16, 0
    %p64 = por %p62, %p63
    %s66 = sadd.s32 %s65, 1
    %p69 = scmp.eq.s32.totalorder %s10, 1
    %p70 = scmp.ne.s32.totalorder %s65, %s67
    %p71 = scmp.eq.s32.totalorder %s10, 0
    %p72 = por %p70, %p71
    %p73 = scmp.ne.s32.totalorder %s65, %s67
    %p74 = scmp.eq.s32.totalorder %s15, 1
    %p75 = por %p73, %p74
    %p76 = scmp.ne.s32.totalorder %s67, %s68
    %p77 = scmp.eq.s32.totalorder %s15, 0
    %p78 = por %p76, %p77
    %p79 = scmp.ne.s32.totalorder %s67, %s68
    %p80 = scmp.eq.s32.totalorder %s16, 1
    %p81 = por %p79, %p80
    %p83 = scmp.ne.s32.totalorder %s68, %s82
    %p84 = scmp.eq.s32.totalorder %s16, 0
    %p85 = por %p83, %p84
    %s87 = sadd.s32 %s86, 1
    %p90 = scmp.eq.s32.totalorder %s10, 1
    %p91 = scmp.ne.s32.totalorder %s86, %s88
    %p92 = scmp.eq.s32.totalorder %s10, 0
    %p93 = por %p91, %p92
    %p94 = scmp.ne.s32.totalorder %s86, %s88
    %p95 = scmp.eq.s32.totalorder %s15, 1
    %p96 = por %p94, %p95
    %p97 = scmp.ne.s32.totalorder %s88, %s89
    %p98 = scmp.eq.s32.totalorder %s15, 0
    %p99 = por %p97, %p98
    %p100 = scmp.ne.s32.totalorder %s88, %s89
    %p101 = scmp.eq.s32.totalorder %s16, 1
    %p102 = por %p100, %p101
    %p104 = scmp.ne.s32.totalorder %s89, %s103
    %p105 = scmp.eq.s32.totalorder %s16, 0
    %p106 = por %p104, %p105
    %s107 = ssub.s32 %s10, %s17
    %p108 = scmp.eq.s32.totalorder %s107, 0
    %s110 = sadd.s32 %s109, 1
    %s111 = scalar_select %p108, %s109, %s110
    %p114 = pneg %p108
    %p115 = scmp.eq.s32.totalorder %s10, 1
    %p116 = por %p114, %p115
    %p117 = scmp.ne.s32.totalorder %s109, %s112
    %p118 = scmp.eq.s32.totalorder %s10, 0
    %p119 = por %p117, %p118
    %p120 = scmp.ne.s32.totalorder %s109, %s112
    %p121 = scmp.eq.s32.totalorder %s15, 1
    %p122 = por %p120, %p121
    %p123 = scmp.ne.s32.totalorder %s112, %s113
    %p124 = scmp.eq.s32.totalorder %s15, 0
    %p125 = por %p123, %p124
    %p126 = scmp.ne.s32.totalorder %s112, %s113
    %p127 = scmp.eq.s32.totalorder %s16, 1
    %p128 = por %p126, %p127
    %p130 = scmp.ne.s32.totalorder %s113, %s129
    %p131 = scmp.eq.s32.totalorder %s16, 0
    %p132 = por %p130, %p131
    %p133 = scmp.le.s32.totalorder 1, %s10
    %p134 = scmp.lt.s32.totalorder %s10, 3
    %p135 = pnand %p133, %p134
    %p136 = pneg %p135
    // Predicated region
    $region9: #{patch_soft_shift_forward.1} parent=5 // pred_check
      _
    $region10: #{patch_soft_shift_forward.1} parent=5 // pred_check_branch
      %138 = sbr.rel (%p135) target = $region12
    $region11: #{patch_soft_shift_forward.1} parent=5 // pred_region
      %s139 = ssub.s32 %s10, 1
      // Predicated region
      $region13: #{patch_soft_shift_forward.1} parent=11 // pred_check
        %p140 = pneg %p57
      $region14: #{patch_soft_shift_forward.1} parent=11 // pred_check_branch
        %142 = sbr.rel (%p140) target = $region16
      $region15: #{patch_soft_shift_forward.1} parent=11 // pred_region
        _
      $region16: #{patch_soft_shift_forward.1} parent=11 // pred_fallthru
        _
      // Predicated region
      $region17: #{patch_soft_shift_forward.1} parent=11 // pred_check
        %p143 = pneg %p78
      $region18: #{patch_soft_shift_forward.1} parent=11 // pred_check_branch
        %145 = sbr.rel (%p143) target = $region20
      $region19: #{patch_soft_shift_forward.1} parent=11 // pred_region
        _
      $region20: #{patch_soft_shift_forward.1} parent=11 // pred_fallthru
        _
      // Predicated region
      $region21: #{patch_soft_shift_forward.1} parent=11 // pred_check
        %p146 = pneg %p99
      $region22: #{patch_soft_shift_forward.1} parent=11 // pred_check_branch
        %148 = sbr.rel (%p146) target = $region24
      $region23: #{patch_soft_shift_forward.1} parent=11 // pred_region
        _
      $region24: #{patch_soft_shift_forward.1} parent=11 // pred_fallthru
        _
    $region12: #{patch_soft_shift_forward.1} parent=5 // pred_fallthru
      _
    %p149 = scmp.lt.s32.totalorder %s10, 2
    // Predicated region
    $region25: #{patch_soft_shift_forward.1} parent=5 // pred_check
      %p150 = pneg %p149
    $region26: #{patch_soft_shift_forward.1} parent=5 // pred_check_branch
      %152 = sbr.rel (%p150) target = $region28
    $region27: #{patch_soft_shift_forward.1} parent=5 // pred_region
      // Predicated region
      $region29: #{patch_soft_shift_forward.1} parent=27 // pred_check
        %p153 = pneg %p30
      $region30: #{patch_soft_shift_forward.1} parent=27 // pred_check_branch
        %155 = sbr.rel (%p153) target = $region32
      $region31: #{patch_soft_shift_forward.1} parent=27 // pred_region
        %p156 = scmp.lt.s32.totalorder %s10, 1
        %s157 = scalar_select %p156, %s10, 1
        %s158 = smul.addr %s157, 16
        %s159 = smul.addr %s158, 8
        %s160 = scalar_lea.vmem %s0, %s159
      $region32: #{patch_soft_shift_forward.1} parent=27 // pred_fallthru
        _
    $region28: #{patch_soft_shift_forward.1} parent=5 // pred_fallthru
      _
    %p161 = scmp.le.s32.totalorder 1, %s10
    %p162 = scmp.lt.s32.totalorder %s10, 3
    %p163 = pnand %p161, %p162
    %p164 = pneg %p163
    // Predicated region
    $region33: #{patch_soft_shift_forward.1} parent=5 // pred_check
      _
    $region34: #{patch_soft_shift_forward.1} parent=5 // pred_check_branch
      %166 = sbr.rel (%p163) target = $region36
    $region35: #{patch_soft_shift_forward.1} parent=5 // pred_region
      %s167 = ssub.s32 %s10, 1
      %p168 = scmp.lt.s32.totalorder %s15, 1
      %s169 = scalar_select %p168, %s15, 1
      %s170 = smul.addr %s169, 16
      %s171 = smul.addr %s170, 8
      %s172 = scalar_lea.vmem %s0, %s171
      %p173 = pneg %p36
      %p174 = pneg %p33
      %p175 = pneg %p57
      %p176 = pneg %p54
      %p177 = pneg %p78
      %p178 = pneg %p75
      %p179 = pneg %p99
      %p180 = pneg %p96
      %p181 = pneg %p125
      %p182 = pneg %p122
      %p183 = scmp.lt.s32.totalorder %s15, 1
      %s184 = scalar_select %p183, %s15, 1
      %s185 = smul.addr %s184, 24
      %s186 = smul.addr %s185, 8
      %s187 = scalar_lea.vmem %s4, %s186
      %p188 = scmp.lt.s32.totalorder %s15, 1
      %s189 = scalar_select %p188, %s15, 1
      %s190 = smul.addr %s189, 16
      %s191 = smul.addr %s190, 8
      %s192 = scalar_lea.vmem %s0, %s191
      %p193 = scmp.lt.s32.totalorder %s15, 1
      %s194 = scalar_select %p193, %s15, 1
      %s195 = smul.addr %s194, 24
      %s196 = smul.addr %s195, 8
      %s197 = scalar_lea.vmem %s4, %s196
      %v199 = vld [vmem:[%s192] sm:$0xff]
      %v200 = vld [vmem:[%s192 + $0x8] sm:$0xff]
      %v201 = vld [vmem:[%s192 + $0x10] sm:$0xff]
      %v202 = vld [vmem:[%s192 + $0x18] sm:$0xff]
      %v203 = vld [vmem:[%s192 + $0x20] sm:$0xff]
      %v204 = vld [vmem:[%s192 + $0x28] sm:$0xff]
      %v205 = vld [vmem:[%s192 + $0x30] sm:$0xff]
      %v206 = vld [vmem:[%s192 + $0x38] sm:$0xff]
      %v207 = vld [vmem:[%s192 + $0x40] sm:$0xff]
      %v208 = vld [vmem:[%s192 + $0x48] sm:$0xff]
      %v209 = vld [vmem:[%s192 + $0x50] sm:$0xff]
      %v210 = vld [vmem:[%s192 + $0x58] sm:$0xff]
      %v211 = vld [vmem:[%s192 + $0x60] sm:$0xff]
      %v212 = vld [vmem:[%s192 + $0x68] sm:$0xff]
      %v213 = vld [vmem:[%s192 + $0x70] sm:$0xff]
      %v214 = vld [vmem:[%s192 + $0x78] sm:$0xff]
      %215 = vst [vmem:[%s197] sm:$0xff] %v199
      %216 = vst [vmem:[%s197 + $0x8] sm:$0xff] %v200
      %217 = vst [vmem:[%s197 + $0x10] sm:$0xff] %v201
      %218 = vst [vmem:[%s197 + $0x18] sm:$0xff] %v202
      %219 = vst [vmem:[%s197 + $0x20] sm:$0xff] %v203
      %220 = vst [vmem:[%s197 + $0x28] sm:$0xff] %v204
      %221 = vst [vmem:[%s197 + $0x30] sm:$0xff] %v205
      %222 = vst [vmem:[%s197 + $0x38] sm:$0xff] %v206
      %223 = vst [vmem:[%s197 + $0x40] sm:$0xff] %v207
      %224 = vst [vmem:[%s197 + $0x48] sm:$0xff] %v208
      %225 = vst [vmem:[%s197 + $0x50] sm:$0xff] %v209
      %226 = vst [vmem:[%s197 + $0x58] sm:$0xff] %v210
      %227 = vst [vmem:[%s197 + $0x60] sm:$0xff] %v211
      %228 = vst [vmem:[%s197 + $0x68] sm:$0xff] %v212
      %229 = vst [vmem:[%s197 + $0x70] sm:$0xff] %v213
      %230 = vst [vmem:[%s197 + $0x78] sm:$0xff] %v214
      %v231 = vld [vmem:[%s192] sm:$0xff]
      %v232 = vld [vmem:[%s192 + $0x8] sm:$0xff]
      %v233 = vld [vmem:[%s192 + $0x10] sm:$0xff]
      %v234 = vld [vmem:[%s192 + $0x18] sm:$0xff]
      %v235 = vld [vmem:[%s192 + $0x20] sm:$0xff]
      %v236 = vld [vmem:[%s192 + $0x28] sm:$0xff]
      %v237 = vld [vmem:[%s192 + $0x30] sm:$0xff]
      %v238 = vld [vmem:[%s192 + $0x38] sm:$0xff]
      %v239 = vld [vmem:[%s192 + $0x40] sm:$0xff]
      %v240 = vld [vmem:[%s192 + $0x48] sm:$0xff]
      %v241 = vld [vmem:[%s192 + $0x50] sm:$0xff]
      %v242 = vld [vmem:[%s192 + $0x58] sm:$0xff]
      %v243 = vld [vmem:[%s192 + $0x60] sm:$0xff]
      %v244 = vld [vmem:[%s192 + $0x68] sm:$0xff]
      %v245 = vld [vmem:[%s192 + $0x70] sm:$0xff]
      %v246 = vld [vmem:[%s192 + $0x78] sm:$0xff]
      %v247 = vld [vmem:[%s1] sm:$0x3]
      %v248 = vmul.f32 %v239, %v239
      %v249 = vmul.f32 %v240, %v240
      %v250 = vmul.f32 %v241, %v241
      %v251 = vmul.f32 %v242, %v242
      %v252 = vmul.f32 %v243, %v243
      %v253 = vmul.f32 %v244, %v244
      %v254 = vmul.f32 %v245, %v245
      %v255 = vmul.f32 %v246, %v246
      %v256 = vadd.f32 %v248, %v250
      %v257 = vadd.f32 %v256, %v252
      %v258 = vadd.f32 %v257, %v254
      %v259 = vrot.slane %v258, 4
      %v260 = vadd.f32 %v258, %v259
      %v261 = vrot.slane %v260, 2
      %v262 = vadd.f32 %v260, %v261
      %v263 = vrot.slane %v262, 1
      %v264 = vadd.f32 %v262, %v263
      %v265 = vadd.f32 %v249, %v251
      %v266 = vadd.f32 %v265, %v253
      %v267 = vadd.f32 %v266, %v255
      %v268 = vrot.slane %v267, 4
      %v269 = vadd.f32 %v267, %v268
      %v270 = vrot.slane %v269, 2
      %v271 = vadd.f32 %v269, %v270
      %v272 = vrot.slane %v271, 1
      %v273 = vadd.f32 %v271, %v272
      %v274 = vrsqrt.pop %v264
      %v275 = vmul.f32 %v274, %v264
      %v276 = vmul.f32 %v275, %v274
      %v277 = vmul.f32 0.5, %v276
      %v278 = vsub.f32 1.5, %v277
      %v279 = vmul.f32 %v274, %v278
      %v280 = vmul.f32 %v264, %v279
      %vm281 = vcmp.eq.f32.partialorder %v264, inf
      %v282 = vsel %vm281, %v264, %v280
      %vm283 = vcmp.eq.f32.partialorder %v264, 0.0
      %v284 = vand.u32 %v264, 2147483648
      %v285 = vsel %vm283, %v284, %v282
      %v286 = vrsqrt.pop %v273
      %v287 = vmul.f32 %v286, %v273
      %v288 = vmul.f32 %v287, %v286
      %v289 = vmul.f32 0.5, %v288
      %v290 = vsub.f32 1.5, %v289
      %v291 = vmul.f32 %v286, %v290
      %v292 = vmul.f32 %v273, %v291
      %vm293 = vcmp.eq.f32.partialorder %v273, inf
      %v294 = vsel %vm293, %v273, %v292
      %vm295 = vcmp.eq.f32.partialorder %v273, 0.0
      %v296 = vand.u32 %v273, 2147483648
      %v297 = vsel %vm295, %v296, %v294
      %v298 = vmax.f32 %v285, 0.0001
      %v299 = vmax.f32 %v297, 0.0001
      %v300 = vrcp.pop %v298
      %v301 = vmul.f32 %v298, %v300
      %v302 = vsub.f32 1.0, %v301
      %v303 = vmul.f32 %v300, %v302
      %v304 = vadd.f32 %v300, %v303
      %vm305 = vweird.f32 %v298
      %vm306 = vweird.f32 %v300
      %vm307 = vmor %vm305, %vm306
      %v308 = vsel %vm307, %v300, %v304
      %v309 = vand.u32 2147483647, %v298
      %vm310 = vcmp.eq.f32.partialorder %v309, 8.507059e+37
      %v311 = vand.u32 %v298, 2147483648
      %v312 = vor.u32 1.1754944e-38, %v311
      %v313 = vsel %vm310, %v312, %v308
      %v314 = vmul.f32 1.0, %v313
      %v315 = vrcp.pop %v299
      %v316 = vmul.f32 %v299, %v315
      %v317 = vsub.f32 1.0, %v316
      %v318 = vmul.f32 %v315, %v317
      %v319 = vadd.f32 %v315, %v318
      %vm320 = vweird.f32 %v299
      %vm321 = vweird.f32 %v315
      %vm322 = vmor %vm320, %vm321
      %v323 = vsel %vm322, %v315, %v319
      %v324 = vand.u32 2147483647, %v299
      %vm325 = vcmp.eq.f32.partialorder %v324, 8.507059e+37
      %v326 = vand.u32 %v299, 2147483648
      %v327 = vor.u32 1.1754944e-38, %v326
      %v328 = vsel %vm325, %v327, %v323
      %v329 = vmul.f32 1.0, %v328
      %v330 = vmul.f32 %v239, %v314
      %v331 = vmul.f32 %v240, %v329
      %v332 = vmul.f32 %v241, %v314
      %v333 = vmul.f32 %v242, %v329
      %v334 = vmul.f32 %v243, %v314
      %v335 = vmul.f32 %v244, %v329
      %v336 = vmul.f32 %v245, %v314
      %v337 = vmul.f32 %v246, %v329
      %v338 = vld [vmem:[%s2] ss:$2 sm:$0x3]
      %s339 = scalar_lea.vmem %s2, 1
      %v340 = vld [vmem:[%s339] ss:$2 sm:$0x3]
      %v341 = vld [vmem:[%s3] sm:$0xff]
      %v342 = vld [vmem:[%s3 + $0x8] sm:$0xff]
      %v343 = vld [vmem:[%s3 + $0x10] sm:$0xff]
      %v344 = vld [vmem:[%s3 + $0x18] sm:$0xff]
      %v345 = vld [vmem:[%s3 + $0x20] sm:$0xff]
      %v346 = vld [vmem:[%s3 + $0x28] sm:$0xff]
      %v347 = vld [vmem:[%s3 + $0x30] sm:$0xff]
      %v348 = vld [vmem:[%s3 + $0x38] sm:$0xff]
      %v349 = vld [vmem:[%s3 + $0x40] sm:$0xff]
      %v350 = vld [vmem:[%s3 + $0x48] sm:$0xff]
      %v351 = vld [vmem:[%s3 + $0x50] sm:$0xff]
      %v352 = vld [vmem:[%s3 + $0x58] sm:$0xff]
      %v353 = vld [vmem:[%s3 + $0x60] sm:$0xff]
      %v354 = vld [vmem:[%s3 + $0x68] sm:$0xff]
      %v355 = vld [vmem:[%s3 + $0x70] sm:$0xff]
      %v356 = vld [vmem:[%s3 + $0x78] sm:$0xff]
      %v357 = vld [vmem:[%s3 + $0x80] sm:$0xff]
      %v358 = vld [vmem:[%s3 + $0x88] sm:$0xff]
      %v359 = vld [vmem:[%s3 + $0x90] sm:$0xff]
      %v360 = vld [vmem:[%s3 + $0x98] sm:$0xff]
      %v361 = vld [vmem:[%s3 + $0xa0] sm:$0xff]
      %v362 = vld [vmem:[%s3 + $0xa8] sm:$0xff]
      %v363 = vld [vmem:[%s3 + $0xb0] sm:$0xff]
      %v364 = vld [vmem:[%s3 + $0xb8] sm:$0xff]
      %v365 = vld [vmem:[%s3 + $0xc0] sm:$0xff]
      %v366 = vld [vmem:[%s3 + $0xc8] sm:$0xff]
      %v367 = vld [vmem:[%s3 + $0xd0] sm:$0xff]
      %v368 = vld [vmem:[%s3 + $0xd8] sm:$0xff]
      %v369 = vld [vmem:[%s3 + $0xe0] sm:$0xff]
      %v370 = vld [vmem:[%s3 + $0xe8] sm:$0xff]
      %v371 = vld [vmem:[%s3 + $0xf0] sm:$0xff]
      %v372 = vld [vmem:[%s3 + $0xf8] sm:$0xff]
      %373 = vrot.lane.b32.xlu0 %v231, 1
      %v374 = vpop.permute.xlu0 %373
      %375 = vrot.lane.b32.xlu0 %v233, 1
      %v376 = vpop.permute.xlu0 %375
      %377 = vrot.lane.b32.xlu0 %v235, 1
      %v378 = vpop.permute.xlu0 %377
      %379 = vrot.lane.b32.xlu0 %v237, 1
      %v380 = vpop.permute.xlu0 %379
      %381 = vrot.lane.b32.xlu0 %v232, 1
      %v382 = vpop.permute.xlu0 %381
      %383 = vrot.lane.b32.xlu0 %v234, 1
      %v384 = vpop.permute.xlu0 %383
      %385 = vrot.lane.b32.xlu0 %v236, 1
      %v386 = vpop.permute.xlu0 %385
      %387 = vrot.lane.b32.xlu0 %v238, 1
      %v388 = vpop.permute.xlu0 %387
      %v389 = vlaneseq
      %v390 = vand.u32 %v389, 127
      %vm391 = vcmp.lt.s32.totalorder %v390, 1
      %v392 = vsel %vm391, %v374, %v382
      %v393 = vsel %vm391, %v376, %v384
      %v394 = vsel %vm391, %v378, %v386
      %v395 = vsel %vm391, %v380, %v388
      %v396 = vsel %vm391, %v382, %v374
      %v397 = vsel %vm391, %v384, %v376
      %v398 = vsel %vm391, %v386, %v378
      %v399 = vsel %vm391, %v388, %v380
      %v401 = vperm.slane %v338, 0
      %v402 = vperm.slane %v338, 1
      %v405 = vmul.f32 %v396, %v401
      %v406 = vmul.f32 %v392, %v402
      %v407 = vmul.f32 %v397, %v401
      %v408 = vmul.f32 %v393, %v402
      %v409 = vmul.f32 %v398, %v401
      %v410 = vmul.f32 %v394, %v402
      %v411 = vmul.f32 %v399, %v401
      %v412 = vmul.f32 %v395, %v402
      %413 = vrot.lane.b32.xlu0 %v231, 127
      %v414 = vpop.permute.xlu0 %413
      %415 = vrot.lane.b32.xlu0 %v233, 127
      %v416 = vpop.permute.xlu0 %415
      %417 = vrot.lane.b32.xlu0 %v235, 127
      %v418 = vpop.permute.xlu0 %417
      %419 = vrot.lane.b32.xlu0 %v237, 127
      %v420 = vpop.permute.xlu0 %419
      %421 = vrot.lane.b32.xlu0 %v232, 127
      %v422 = vpop.permute.xlu0 %421
      %423 = vrot.lane.b32.xlu0 %v234, 127
      %v424 = vpop.permute.xlu0 %423
      %425 = vrot.lane.b32.xlu0 %v236, 127
      %v426 = vpop.permute.xlu0 %425
      %427 = vrot.lane.b32.xlu0 %v238, 127
      %v428 = vpop.permute.xlu0 %427
      %vm429 = vcmp.lt.s32.totalorder %v390, 127
      %v430 = vsel %vm429, %v414, %v422
      %v431 = vsel %vm429, %v416, %v424
      %v432 = vsel %vm429, %v418, %v426
      %v433 = vsel %vm429, %v420, %v428
      %v434 = vsel %vm429, %v422, %v414
      %v435 = vsel %vm429, %v424, %v416
      %v436 = vsel %vm429, %v426, %v418
      %v437 = vsel %vm429, %v428, %v420
      %v439 = vperm.slane %v340, 0
      %v440 = vperm.slane %v340, 1
      %v443 = vmul.f32 %v430, %v439
      %v444 = vmul.f32 %v434, %v440
      %v445 = vmul.f32 %v431, %v439
      %v446 = vmul.f32 %v435, %v440
      %v447 = vmul.f32 %v432, %v439
      %v448 = vmul.f32 %v436, %v440
      %v449 = vmul.f32 %v433, %v439
      %v450 = vmul.f32 %v437, %v440
      %v451 = vpack.c.bf16 %v232, %v231
      %v452 = vpack.c.bf16 %v234, %v233
      %v453 = vpack.c.bf16 %v236, %v235
      %v454 = vpack.c.bf16 %v238, %v237
      %v455 = vpack.c.bf16 %v406, %v405
      %v456 = vpack.c.bf16 %v408, %v407
      %v457 = vpack.c.bf16 %v410, %v409
      %v458 = vpack.c.bf16 %v412, %v411
      %v459 = vpack.c.bf16 %v444, %v443
      %v460 = vpack.c.bf16 %v446, %v445
      %v461 = vpack.c.bf16 %v448, %v447
      %v462 = vpack.c.bf16 %v450, %v449
      %v475 = vunpack.c.l.b16 %v451
      %v476 = vunpack.c.h.b16 %v451
      %v477 = vunpack.c.l.b16 %v452
      %v478 = vunpack.c.h.b16 %v452
      %v479 = vunpack.c.l.b16 %v453
      %v480 = vunpack.c.h.b16 %v453
      %v481 = vunpack.c.l.b16 %v454
      %v482 = vunpack.c.h.b16 %v454
      %v483 = vunpack.c.l.b16 %v455
      %v484 = vunpack.c.h.b16 %v455
      %v485 = vunpack.c.l.b16 %v456
      %v486 = vunpack.c.h.b16 %v456
      %v487 = vunpack.c.l.b16 %v457
      %v488 = vunpack.c.h.b16 %v457
      %v489 = vunpack.c.l.b16 %v458
      %v490 = vunpack.c.h.b16 %v458
      %v491 = vunpack.c.l.b16 %v459
      %v492 = vunpack.c.h.b16 %v459
      %v493 = vunpack.c.l.b16 %v460
      %v494 = vunpack.c.h.b16 %v460
      %v495 = vunpack.c.l.b16 %v461
      %v496 = vunpack.c.h.b16 %v461
      %v497 = vunpack.c.l.b16 %v462
      %v498 = vunpack.c.h.b16 %v462
      %v499 = vpack.c.b16 %v477, %v475
      %v500 = vpack.c.b16 %v478, %v476
      %v501 = vpack.c.b16 %v481, %v479
      %v502 = vpack.c.b16 %v482, %v480
      %v503 = vpack.c.b16 %v485, %v483
      %v504 = vpack.c.b16 %v486, %v484
      %v505 = vpack.c.b16 %v489, %v487
      %v506 = vpack.c.b16 %v490, %v488
      %v507 = vpack.c.b16 %v493, %v491
      %v508 = vpack.c.b16 %v494, %v492
      %v509 = vpack.c.b16 %v497, %v495
      %v510 = vpack.c.b16 %v498, %v496
      %v555 = vunpack.c.l.b16 %v341
      %v556 = vunpack.c.h.b16 %v341
      %v557 = vunpack.c.l.b16 %v342
      %v558 = vunpack.c.h.b16 %v342
      %v559 = vunpack.c.l.b16 %v343
      %v560 = vunpack.c.h.b16 %v343
      %v561 = vunpack.c.l.b16 %v344
      %v562 = vunpack.c.h.b16 %v344
      %v563 = vunpack.c.l.b16 %v345
      %v564 = vunpack.c.h.b16 %v345
      %v565 = vunpack.c.l.b16 %v346
      %v566 = vunpack.c.h.b16 %v346
      %v567 = vunpack.c.l.b16 %v347
      %v568 = vunpack.c.h.b16 %v347
      %v569 = vunpack.c.l.b16 %v348
      %v570 = vunpack.c.h.b16 %v348
      %v571 = vunpack.c.l.b16 %v349
      %v572 = vunpack.c.h.b16 %v349
      %v573 = vunpack.c.l.b16 %v350
      %v574 = vunpack.c.h.b16 %v350
      %v575 = vunpack.c.l.b16 %v351
      %v576 = vunpack.c.h.b16 %v351
      %v577 = vunpack.c.l.b16 %v352
      %v578 = vunpack.c.h.b16 %v352
      %v579 = vunpack.c.l.b16 %v353
      %v580 = vunpack.c.h.b16 %v353
      %v581 = vunpack.c.l.b16 %v354
      %v582 = vunpack.c.h.b16 %v354
      %v583 = vunpack.c.l.b16 %v355
      %v584 = vunpack.c.h.b16 %v355
      %v585 = vunpack.c.l.b16 %v356
      %v586 = vunpack.c.h.b16 %v356
      %v587 = vunpack.c.l.b16 %v357
      %v588 = vunpack.c.h.b16 %v357
      %v589 = vunpack.c.l.b16 %v358
      %v590 = vunpack.c.h.b16 %v358
      %v591 = vunpack.c.l.b16 %v359
      %v592 = vunpack.c.h.b16 %v359
      %v593 = vunpack.c.l.b16 %v360
      %v594 = vunpack.c.h.b16 %v360
      %v595 = vunpack.c.l.b16 %v361
      %v596 = vunpack.c.h.b16 %v361
      %v597 = vunpack.c.l.b16 %v362
      %v598 = vunpack.c.h.b16 %v362
      %v599 = vunpack.c.l.b16 %v363
      %v600 = vunpack.c.h.b16 %v363
      %v601 = vunpack.c.l.b16 %v364
      %v602 = vunpack.c.h.b16 %v364
      %v603 = vunpack.c.l.b16 %v365
      %v604 = vunpack.c.h.b16 %v365
      %v605 = vunpack.c.l.b16 %v366
      %v606 = vunpack.c.h.b16 %v366
      %v607 = vunpack.c.l.b16 %v367
      %v608 = vunpack.c.h.b16 %v367
      %v609 = vunpack.c.l.b16 %v368
      %v610 = vunpack.c.h.b16 %v368
      %v611 = vunpack.c.l.b16 %v369
      %v612 = vunpack.c.h.b16 %v369
      %v613 = vunpack.c.l.b16 %v370
      %v614 = vunpack.c.h.b16 %v370
      %v615 = vunpack.c.l.b16 %v371
      %v616 = vunpack.c.h.b16 %v371
      %v617 = vunpack.c.l.b16 %v372
      %v618 = vunpack.c.h.b16 %v372
      %v619 = vpack.c.b16 %v557, %v555
      %v620 = vpack.c.b16 %v558, %v556
      %v621 = vpack.c.b16 %v561, %v559
      %v622 = vpack.c.b16 %v562, %v560
      %v623 = vpack.c.b16 %v565, %v563
      %v624 = vpack.c.b16 %v566, %v564
      %v625 = vpack.c.b16 %v569, %v567
      %v626 = vpack.c.b16 %v570, %v568
      %v627 = vpack.c.b16 %v573, %v571
      %v628 = vpack.c.b16 %v574, %v572
      %v629 = vpack.c.b16 %v577, %v575
      %v630 = vpack.c.b16 %v578, %v576
      %v631 = vpack.c.b16 %v581, %v579
      %v632 = vpack.c.b16 %v582, %v580
      %v633 = vpack.c.b16 %v585, %v583
      %v634 = vpack.c.b16 %v586, %v584
      %v635 = vpack.c.b16 %v589, %v587
      %v636 = vpack.c.b16 %v590, %v588
      %v637 = vpack.c.b16 %v593, %v591
      %v638 = vpack.c.b16 %v594, %v592
      %v639 = vpack.c.b16 %v597, %v595
      %v640 = vpack.c.b16 %v598, %v596
      %v641 = vpack.c.b16 %v601, %v599
      %v642 = vpack.c.b16 %v602, %v600
      %v643 = vpack.c.b16 %v605, %v603
      %v644 = vpack.c.b16 %v606, %v604
      %v645 = vpack.c.b16 %v609, %v607
      %v646 = vpack.c.b16 %v610, %v608
      %v647 = vpack.c.b16 %v613, %v611
      %v648 = vpack.c.b16 %v614, %v612
      %v649 = vpack.c.b16 %v617, %v615
      %v650 = vpack.c.b16 %v618, %v616
      %683 = vmatpush.bf16.xpose.msra.mxu0 %v633
      %684 = vmatpush.bf16.xpose.msra.mxu0 %v631
      %685 = vmatpush.bf16.xpose.msra.mxu0 %v629
      %686 = vmatpush.bf16.xpose.msra.mxu0 %v627
      %687 = vmatpush.bf16.xpose.msra.mxu0 %v625
      %688 = vmatpush.bf16.xpose.msra.mxu0 %v623
      %689 = vmatpush.bf16.xpose.msra.mxu0 %v621
      %690 = vmatpush.bf16.xpose.msra.mxu0 %v619
      %691 = vmatmul.bf16.gmra.mxu0 %v499
      %v692 = vpop.f32.mrf.mxu0
      %v693 = vadd.f32 0.0, %v692
      %v694 = vpop.f32.mrf.mxu0
      %v695 = vadd.f32 0.0, %v694
      %696 = vmatmul.bf16.gmra.mxu0 %v501
      %v697 = vpop.f32.mrf.mxu0
      %v698 = vadd.f32 0.0, %v697
      %v699 = vpop.f32.mrf.mxu0
      %v700 = vadd.f32 0.0, %v699
      %701 = vmatmul.bf16.gmra.mxu0 %v503
      %v702 = vpop.f32.mrf.mxu0
      %v703 = vadd.f32 0.0, %v702
      %v704 = vpop.f32.mrf.mxu0
      %v705 = vadd.f32 0.0, %v704
      %706 = vmatmul.bf16.gmra.mxu0 %v505
      %v707 = vpop.f32.mrf.mxu0
      %v708 = vadd.f32 0.0, %v707
      %v709 = vpop.f32.mrf.mxu0
      %v710 = vadd.f32 0.0, %v709
      %711 = vmatmul.bf16.gmra.mxu0 %v507
      %v712 = vpop.f32.mrf.mxu0
      %v713 = vadd.f32 0.0, %v712
      %v714 = vpop.f32.mrf.mxu0
      %v715 = vadd.f32 0.0, %v714
      %716 = vmatmul.bf16.gmra.mxu0 %v509
      %v717 = vpop.f32.mrf.mxu0
      %v718 = vadd.f32 0.0, %v717
      %v719 = vpop.f32.mrf.mxu0
      %v720 = vadd.f32 0.0, %v719
      %721 = vdwg.mxu0
      %722 = vmatpush.bf16.xpose.msra.mxu0 %v634
      %723 = vmatpush.bf16.xpose.msra.mxu0 %v632
      %724 = vmatpush.bf16.xpose.msra.mxu0 %v630
      %725 = vmatpush.bf16.xpose.msra.mxu0 %v628
      %726 = vmatpush.bf16.xpose.msra.mxu0 %v626
      %727 = vmatpush.bf16.xpose.msra.mxu0 %v624
      %728 = vmatpush.bf16.xpose.msra.mxu0 %v622
      %729 = vmatpush.bf16.xpose.msra.mxu0 %v620
      %730 = vmatmul.bf16.gmra.mxu0 %v500
      %v731 = vpop.f32.mrf.mxu0
      %v732 = vadd.f32 %v693, %v731
      %v733 = vpop.f32.mrf.mxu0
      %v734 = vadd.f32 %v695, %v733
      %735 = vmatmul.bf16.gmra.mxu0 %v502
      %v736 = vpop.f32.mrf.mxu0
      %v737 = vadd.f32 %v698, %v736
      %v738 = vpop.f32.mrf.mxu0
      %v739 = vadd.f32 %v700, %v738
      %740 = vmatmul.bf16.gmra.mxu0 %v504
      %v741 = vpop.f32.mrf.mxu0
      %v742 = vadd.f32 %v703, %v741
      %v743 = vpop.f32.mrf.mxu0
      %v744 = vadd.f32 %v705, %v743
      %745 = vmatmul.bf16.gmra.mxu0 %v506
      %v746 = vpop.f32.mrf.mxu0
      %v747 = vadd.f32 %v708, %v746
      %v748 = vpop.f32.mrf.mxu0
      %v749 = vadd.f32 %v710, %v748
      %750 = vmatmul.bf16.gmra.mxu0 %v508
      %v751 = vpop.f32.mrf.mxu0
      %v752 = vadd.f32 %v713, %v751
      %v753 = vpop.f32.mrf.mxu0
      %v754 = vadd.f32 %v715, %v753
      %755 = vmatmul.bf16.gmra.mxu0 %v510
      %v756 = vpop.f32.mrf.mxu0
      %v757 = vadd.f32 %v718, %v756
      %v758 = vpop.f32.mrf.mxu0
      %v759 = vadd.f32 %v720, %v758
      %760 = vdwg.mxu0
      %761 = vmatpush.bf16.xpose.msra.mxu0 %v649
      %762 = vmatpush.bf16.xpose.msra.mxu0 %v647
      %763 = vmatpush.bf16.xpose.msra.mxu0 %v645
      %764 = vmatpush.bf16.xpose.msra.mxu0 %v643
      %765 = vmatpush.bf16.xpose.msra.mxu0 %v641
      %766 = vmatpush.bf16.xpose.msra.mxu0 %v639
      %767 = vmatpush.bf16.xpose.msra.mxu0 %v637
      %768 = vmatpush.bf16.xpose.msra.mxu0 %v635
      %769 = vmatmul.bf16.gmra.mxu0 %v499
      %v770 = vpop.f32.mrf.mxu0
      %v771 = vadd.f32 0.0, %v770
      %v772 = vpop.f32.mrf.mxu0
      %v773 = vadd.f32 0.0, %v772
      %774 = vmatmul.bf16.gmra.mxu0 %v501
      %v775 = vpop.f32.mrf.mxu0
      %v776 = vadd.f32 0.0, %v775
      %v777 = vpop.f32.mrf.mxu0
      %v778 = vadd.f32 0.0, %v777
      %779 = vmatmul.bf16.gmra.mxu0 %v503
      %v780 = vpop.f32.mrf.mxu0
      %v781 = vadd.f32 0.0, %v780
      %v782 = vpop.f32.mrf.mxu0
      %v783 = vadd.f32 0.0, %v782
      %784 = vmatmul.bf16.gmra.mxu0 %v505
      %v785 = vpop.f32.mrf.mxu0
      %v786 = vadd.f32 0.0, %v785
      %v787 = vpop.f32.mrf.mxu0
      %v788 = vadd.f32 0.0, %v787
      %789 = vmatmul.bf16.gmra.mxu0 %v507
      %v790 = vpop.f32.mrf.mxu0
      %v791 = vadd.f32 0.0, %v790
      %v792 = vpop.f32.mrf.mxu0
      %v793 = vadd.f32 0.0, %v792
      %794 = vmatmul.bf16.gmra.mxu0 %v509
      %v795 = vpop.f32.mrf.mxu0
      %v796 = vadd.f32 0.0, %v795
      %v797 = vpop.f32.mrf.mxu0
      %v798 = vadd.f32 0.0, %v797
      %799 = vdwg.mxu0
      %800 = vmatpush.bf16.xpose.msra.mxu0 %v650
      %801 = vmatpush.bf16.xpose.msra.mxu0 %v648
      %802 = vmatpush.bf16.xpose.msra.mxu0 %v646
      %803 = vmatpush.bf16.xpose.msra.mxu0 %v644
      %804 = vmatpush.bf16.xpose.msra.mxu0 %v642
      %805 = vmatpush.bf16.xpose.msra.mxu0 %v640
      %806 = vmatpush.bf16.xpose.msra.mxu0 %v638
      %807 = vmatpush.bf16.xpose.msra.mxu0 %v636
      %808 = vmatmul.bf16.gmra.mxu0 %v500
      %v809 = vpop.f32.mrf.mxu0
      %v810 = vadd.f32 %v771, %v809
      %v811 = vpop.f32.mrf.mxu0
      %v812 = vadd.f32 %v773, %v811
      %813 = vmatmul.bf16.gmra.mxu0 %v502
      %v814 = vpop.f32.mrf.mxu0
      %v815 = vadd.f32 %v776, %v814
      %v816 = vpop.f32.mrf.mxu0
      %v817 = vadd.f32 %v778, %v816
      %818 = vmatmul.bf16.gmra.mxu0 %v504
      %v819 = vpop.f32.mrf.mxu0
      %v820 = vadd.f32 %v781, %v819
      %v821 = vpop.f32.mrf.mxu0
      %v822 = vadd.f32 %v783, %v821
      %823 = vmatmul.bf16.gmra.mxu0 %v506
      %v824 = vpop.f32.mrf.mxu0
      %v825 = vadd.f32 %v786, %v824
      %v826 = vpop.f32.mrf.mxu0
      %v827 = vadd.f32 %v788, %v826
      %828 = vmatmul.bf16.gmra.mxu0 %v508
      %v829 = vpop.f32.mrf.mxu0
      %v830 = vadd.f32 %v791, %v829
      %v831 = vpop.f32.mrf.mxu0
      %v832 = vadd.f32 %v793, %v831
      %833 = vmatmul.bf16.gmra.mxu0 %v510
      %v834 = vpop.f32.mrf.mxu0
      %v835 = vadd.f32 %v796, %v834
      %v836 = vpop.f32.mrf.mxu0
      %v837 = vadd.f32 %v798, %v836
      %838 = vdwg.mxu0
      %839 = vmatpush.bf16.msra.mxu0 %v633
      %840 = vmatpush.bf16.msra.mxu0 %v631
      %841 = vmatpush.bf16.msra.mxu0 %v629
      %842 = vmatpush.bf16.msra.mxu0 %v627
      %843 = vmatpush.bf16.msra.mxu0 %v625
      %844 = vmatpush.bf16.msra.mxu0 %v623
      %845 = vmatpush.bf16.msra.mxu0 %v621
      %846 = vmatpush.bf16.msra.mxu0 %v619
      %847 = vmatmul.bf16.gmra.mxu0 %v499
      %v848 = vpop.f32.mrf.mxu0
      %v849 = vadd.f32 0.0, %v848
      %v850 = vpop.f32.mrf.mxu0
      %v851 = vadd.f32 0.0, %v850
      %852 = vmatmul.bf16.gmra.mxu0 %v501
      %v853 = vpop.f32.mrf.mxu0
      %v854 = vadd.f32 0.0, %v853
      %v855 = vpop.f32.mrf.mxu0
      %v856 = vadd.f32 0.0, %v855
      %857 = vmatmul.bf16.gmra.mxu0 %v503
      %v858 = vpop.f32.mrf.mxu0
      %v859 = vadd.f32 0.0, %v858
      %v860 = vpop.f32.mrf.mxu0
      %v861 = vadd.f32 0.0, %v860
      %862 = vmatmul.bf16.gmra.mxu0 %v505
      %v863 = vpop.f32.mrf.mxu0
      %v864 = vadd.f32 0.0, %v863
      %v865 = vpop.f32.mrf.mxu0
      %v866 = vadd.f32 0.0, %v865
      %867 = vmatmul.bf16.gmra.mxu0 %v507
      %v868 = vpop.f32.mrf.mxu0
      %v869 = vadd.f32 0.0, %v868
      %v870 = vpop.f32.mrf.mxu0
      %v871 = vadd.f32 0.0, %v870
      %872 = vmatmul.bf16.gmra.mxu0 %v509
      %v873 = vpop.f32.mrf.mxu0
      %v874 = vadd.f32 0.0, %v873
      %v875 = vpop.f32.mrf.mxu0
      %v876 = vadd.f32 0.0, %v875
      %877 = vdwg.mxu0
      %878 = vmatpush.bf16.msra.mxu0 %v649
      %879 = vmatpush.bf16.msra.mxu0 %v647
      %880 = vmatpush.bf16.msra.mxu0 %v645
      %881 = vmatpush.bf16.msra.mxu0 %v643
      %882 = vmatpush.bf16.msra.mxu0 %v641
      %883 = vmatpush.bf16.msra.mxu0 %v639
      %884 = vmatpush.bf16.msra.mxu0 %v637
      %885 = vmatpush.bf16.msra.mxu0 %v635
      %886 = vmatmul.bf16.gmra.mxu0 %v500
      %v887 = vpop.f32.mrf.mxu0
      %v888 = vadd.f32 %v849, %v887
      %v889 = vpop.f32.mrf.mxu0
      %v890 = vadd.f32 %v851, %v889
      %891 = vmatmul.bf16.gmra.mxu0 %v502
      %v892 = vpop.f32.mrf.mxu0
      %v893 = vadd.f32 %v854, %v892
      %v894 = vpop.f32.mrf.mxu0
      %v895 = vadd.f32 %v856, %v894
      %896 = vmatmul.bf16.gmra.mxu0 %v504
      %v897 = vpop.f32.mrf.mxu0
      %v898 = vadd.f32 %v859, %v897
      %v899 = vpop.f32.mrf.mxu0
      %v900 = vadd.f32 %v861, %v899
      %901 = vmatmul.bf16.gmra.mxu0 %v506
      %v902 = vpop.f32.mrf.mxu0
      %v903 = vadd.f32 %v864, %v902
      %v904 = vpop.f32.mrf.mxu0
      %v905 = vadd.f32 %v866, %v904
      %906 = vmatmul.bf16.gmra.mxu0 %v508
      %v907 = vpop.f32.mrf.mxu0
      %v908 = vadd.f32 %v869, %v907
      %v909 = vpop.f32.mrf.mxu0
      %v910 = vadd.f32 %v871, %v909
      %911 = vmatmul.bf16.gmra.mxu0 %v510
      %v912 = vpop.f32.mrf.mxu0
      %v913 = vadd.f32 %v874, %v912
      %v914 = vpop.f32.mrf.mxu0
      %v915 = vadd.f32 %v876, %v914
      %916 = vdwg.mxu0
      %917 = vmatpush.bf16.msra.mxu0 %v634
      %918 = vmatpush.bf16.msra.mxu0 %v632
      %919 = vmatpush.bf16.msra.mxu0 %v630
      %920 = vmatpush.bf16.msra.mxu0 %v628
      %921 = vmatpush.bf16.msra.mxu0 %v626
      %922 = vmatpush.bf16.msra.mxu0 %v624
      %923 = vmatpush.bf16.msra.mxu0 %v622
      %924 = vmatpush.bf16.msra.mxu0 %v620
      %925 = vmatmul.bf16.gmra.mxu0 %v499
      %v926 = vpop.f32.mrf.mxu0
      %v927 = vadd.f32 0.0, %v926
      %v928 = vpop.f32.mrf.mxu0
      %v929 = vadd.f32 0.0, %v928
      %930 = vmatmul.bf16.gmra.mxu0 %v501
      %v931 = vpop.f32.mrf.mxu0
      %v932 = vadd.f32 0.0, %v931
      %v933 = vpop.f32.mrf.mxu0
      %v934 = vadd.f32 0.0, %v933
      %935 = vmatmul.bf16.gmra.mxu0 %v503
      %v936 = vpop.f32.mrf.mxu0
      %v937 = vadd.f32 0.0, %v936
      %v938 = vpop.f32.mrf.mxu0
      %v939 = vadd.f32 0.0, %v938
      %940 = vmatmul.bf16.gmra.mxu0 %v505
      %v941 = vpop.f32.mrf.mxu0
      %v942 = vadd.f32 0.0, %v941
      %v943 = vpop.f32.mrf.mxu0
      %v944 = vadd.f32 0.0, %v943
      %945 = vmatmul.bf16.gmra.mxu0 %v507
      %v946 = vpop.f32.mrf.mxu0
      %v947 = vadd.f32 0.0, %v946
      %v948 = vpop.f32.mrf.mxu0
      %v949 = vadd.f32 0.0, %v948
      %950 = vmatmul.bf16.gmra.mxu0 %v509
      %v951 = vpop.f32.mrf.mxu0
      %v952 = vadd.f32 0.0, %v951
      %v953 = vpop.f32.mrf.mxu0
      %v954 = vadd.f32 0.0, %v953
      %955 = vdwg.mxu0
      %956 = vmatpush.bf16.msra.mxu0 %v650
      %957 = vmatpush.bf16.msra.mxu0 %v648
      %958 = vmatpush.bf16.msra.mxu0 %v646
      %959 = vmatpush.bf16.msra.mxu0 %v644
      %960 = vmatpush.bf16.msra.mxu0 %v642
      %961 = vmatpush.bf16.msra.mxu0 %v640
      %962 = vmatpush.bf16.msra.mxu0 %v638
      %963 = vmatpush.bf16.msra.mxu0 %v636
      %964 = vmatmul.bf16.gmra.mxu0 %v500
      %v965 = vpop.f32.mrf.mxu0
      %v966 = vadd.f32 %v927, %v965
      %v967 = vpop.f32.mrf.mxu0
      %v968 = vadd.f32 %v929, %v967
      %969 = vmatmul.bf16.gmra.mxu0 %v502
      %v970 = vpop.f32.mrf.mxu0
      %v971 = vadd.f32 %v932, %v970
      %v972 = vpop.f32.mrf.mxu0
      %v973 = vadd.f32 %v934, %v972
      %974 = vmatmul.bf16.gmra.mxu0 %v504
      %v975 = vpop.f32.mrf.mxu0
      %v976 = vadd.f32 %v937, %v975
      %v977 = vpop.f32.mrf.mxu0
      %v978 = vadd.f32 %v939, %v977
      %979 = vmatmul.bf16.gmra.mxu0 %v506
      %v980 = vpop.f32.mrf.mxu0
      %v981 = vadd.f32 %v942, %v980
      %v982 = vpop.f32.mrf.mxu0
      %v983 = vadd.f32 %v944, %v982
      %984 = vmatmul.bf16.gmra.mxu0 %v508
      %v985 = vpop.f32.mrf.mxu0
      %v986 = vadd.f32 %v947, %v985
      %v987 = vpop.f32.mrf.mxu0
      %v988 = vadd.f32 %v949, %v987
      %989 = vmatmul.bf16.gmra.mxu0 %v510
      %v990 = vpop.f32.mrf.mxu0
      %v991 = vadd.f32 %v952, %v990
      %v992 = vpop.f32.mrf.mxu0
      %v993 = vadd.f32 %v954, %v992
      %994 = vdwg.mxu0
      %v995 = vpack.c.bf16 %v810, %v732
      %v996 = vpack.c.bf16 %v812, %v734
      %v997 = vpack.c.bf16 %v815, %v737
      %v998 = vpack.c.bf16 %v817, %v739
      %v999 = vpack.c.bf16 %v820, %v742
      %v1000 = vpack.c.bf16 %v822, %v744
      %v1001 = vpack.c.bf16 %v825, %v747
      %v1002 = vpack.c.bf16 %v827, %v749
      %v1003 = vpack.c.bf16 %v830, %v752
      %v1004 = vpack.c.bf16 %v832, %v754
      %v1005 = vpack.c.bf16 %v835, %v757
      %v1006 = vpack.c.bf16 %v837, %v759
      %v1007 = vpack.c.bf16 %v966, %v888
      %v1008 = vpack.c.bf16 %v968, %v890
      %v1009 = vpack.c.bf16 %v971, %v893
      %v1010 = vpack.c.bf16 %v973, %v895
      %v1011 = vpack.c.bf16 %v976, %v898
      %v1012 = vpack.c.bf16 %v978, %v900
      %v1013 = vpack.c.bf16 %v981, %v903
      %v1014 = vpack.c.bf16 %v983, %v905
      %v1015 = vpack.c.bf16 %v986, %v908
      %v1016 = vpack.c.bf16 %v988, %v910
      %v1017 = vpack.c.bf16 %v991, %v913
      %v1018 = vpack.c.bf16 %v993, %v915
      %v1031 = vunpack.c.l.b16 %v995
      %v1032 = vunpack.c.h.b16 %v995
      %v1033 = vunpack.c.l.b16 %v996
      %v1034 = vunpack.c.h.b16 %v996
      %v1035 = vunpack.c.l.b16 %v997
      %v1036 = vunpack.c.h.b16 %v997
      %v1037 = vunpack.c.l.b16 %v998
      %v1038 = vunpack.c.h.b16 %v998
      %v1039 = vunpack.c.l.b16 %v999
      %v1040 = vunpack.c.h.b16 %v999
      %v1041 = vunpack.c.l.b16 %v1000
      %v1042 = vunpack.c.h.b16 %v1000
      %v1043 = vunpack.c.l.b16 %v1001
      %v1044 = vunpack.c.h.b16 %v1001
      %v1045 = vunpack.c.l.b16 %v1002
      %v1046 = vunpack.c.h.b16 %v1002
      %v1047 = vunpack.c.l.b16 %v1003
      %v1048 = vunpack.c.h.b16 %v1003
      %v1049 = vunpack.c.l.b16 %v1004
      %v1050 = vunpack.c.h.b16 %v1004
      %v1051 = vunpack.c.l.b16 %v1005
      %v1052 = vunpack.c.h.b16 %v1005
      %v1053 = vunpack.c.l.b16 %v1006
      %v1054 = vunpack.c.h.b16 %v1006
      %v1055 = vpack.c.b16 %v1033, %v1031
      %v1056 = vpack.c.b16 %v1034, %v1032
      %v1057 = vpack.c.b16 %v1037, %v1035
      %v1058 = vpack.c.b16 %v1038, %v1036
      %v1059 = vpack.c.b16 %v1041, %v1039
      %v1060 = vpack.c.b16 %v1042, %v1040
      %v1061 = vpack.c.b16 %v1045, %v1043
      %v1062 = vpack.c.b16 %v1046, %v1044
      %v1063 = vpack.c.b16 %v1049, %v1047
      %v1064 = vpack.c.b16 %v1050, %v1048
      %v1065 = vpack.c.b16 %v1053, %v1051
      %v1066 = vpack.c.b16 %v1054, %v1052
      %v1091 = vunpack.c.l.b16 %v1007
      %v1092 = vunpack.c.h.b16 %v1007
      %v1093 = vunpack.c.l.b16 %v1008
      %v1094 = vunpack.c.h.b16 %v1008
      %v1095 = vunpack.c.l.b16 %v1009
      %v1096 = vunpack.c.h.b16 %v1009
      %v1097 = vunpack.c.l.b16 %v1010
      %v1098 = vunpack.c.h.b16 %v1010
      %v1099 = vunpack.c.l.b16 %v1011
      %v1100 = vunpack.c.h.b16 %v1011
      %v1101 = vunpack.c.l.b16 %v1012
      %v1102 = vunpack.c.h.b16 %v1012
      %v1103 = vunpack.c.l.b16 %v1013
      %v1104 = vunpack.c.h.b16 %v1013
      %v1105 = vunpack.c.l.b16 %v1014
      %v1106 = vunpack.c.h.b16 %v1014
      %v1107 = vunpack.c.l.b16 %v1015
      %v1108 = vunpack.c.h.b16 %v1015
      %v1109 = vunpack.c.l.b16 %v1016
      %v1110 = vunpack.c.h.b16 %v1016
      %v1111 = vunpack.c.l.b16 %v1017
      %v1112 = vunpack.c.h.b16 %v1017
      %v1113 = vunpack.c.l.b16 %v1018
      %v1114 = vunpack.c.h.b16 %v1018
      %v1115 = vpack.c.b16 %v1093, %v1091
      %v1116 = vpack.c.b16 %v1094, %v1092
      %v1117 = vpack.c.b16 %v1097, %v1095
      %v1118 = vpack.c.b16 %v1098, %v1096
      %v1119 = vpack.c.b16 %v1101, %v1099
      %v1120 = vpack.c.b16 %v1102, %v1100
      %v1121 = vpack.c.b16 %v1105, %v1103
      %v1122 = vpack.c.b16 %v1106, %v1104
      %v1123 = vpack.c.b16 %v1109, %v1107
      %v1124 = vpack.c.b16 %v1110, %v1108
      %v1125 = vpack.c.b16 %v1113, %v1111
      %v1126 = vpack.c.b16 %v1114, %v1112
      %1139 = vrot.lane.b32.xlu0 %v330, 1
      %v1140 = vpop.permute.xlu0 %1139
      %1141 = vrot.lane.b32.xlu0 %v332, 1
      %v1142 = vpop.permute.xlu0 %1141
      %1143 = vrot.lane.b32.xlu0 %v334, 1
      %v1144 = vpop.permute.xlu0 %1143
      %1145 = vrot.lane.b32.xlu0 %v336, 1
      %v1146 = vpop.permute.xlu0 %1145
      %1147 = vrot.lane.b32.xlu0 %v331, 1
      %v1148 = vpop.permute.xlu0 %1147
      %1149 = vrot.lane.b32.xlu0 %v333, 1
      %v1150 = vpop.permute.xlu0 %1149
      %1151 = vrot.lane.b32.xlu0 %v335, 1
      %v1152 = vpop.permute.xlu0 %1151
      %1153 = vrot.lane.b32.xlu0 %v337, 1
      %v1154 = vpop.permute.xlu0 %1153
      %v1155 = vsel %vm391, %v1140, %v1148
      %v1156 = vsel %vm391, %v1142, %v1150
      %v1157 = vsel %vm391, %v1144, %v1152
      %v1158 = vsel %vm391, %v1146, %v1154
      %v1159 = vsel %vm391, %v1148, %v1140
      %v1160 = vsel %vm391, %v1150, %v1142
      %v1161 = vsel %vm391, %v1152, %v1144
      %v1162 = vsel %vm391, %v1154, %v1146
      %v1163 = vmul.f32 %v1159, %v401
      %v1164 = vmul.f32 %v1155, %v402
      %v1165 = vmul.f32 %v1160, %v401
      %v1166 = vmul.f32 %v1156, %v402
      %v1167 = vmul.f32 %v1161, %v401
      %v1168 = vmul.f32 %v1157, %v402
      %v1169 = vmul.f32 %v1162, %v401
      %v1170 = vmul.f32 %v1158, %v402
      %1171 = vrot.lane.b32.xlu0 %v330, 127
      %v1172 = vpop.permute.xlu0 %1171
      %1173 = vrot.lane.b32.xlu0 %v332, 127
      %v1174 = vpop.permute.xlu0 %1173
      %1175 = vrot.lane.b32.xlu0 %v334, 127
      %v1176 = vpop.permute.xlu0 %1175
      %1177 = vrot.lane.b32.xlu0 %v336, 127
      %v1178 = vpop.permute.xlu0 %1177
      %1179 = vrot.lane.b32.xlu0 %v331, 127
      %v1180 = vpop.permute.xlu0 %1179
      %1181 = vrot.lane.b32.xlu0 %v333, 127
      %v1182 = vpop.permute.xlu0 %1181
      %1183 = vrot.lane.b32.xlu0 %v335, 127
      %v1184 = vpop.permute.xlu0 %1183
      %1185 = vrot.lane.b32.xlu0 %v337, 127
      %v1186 = vpop.permute.xlu0 %1185
      %v1187 = vsel %vm429, %v1172, %v1180
      %v1188 = vsel %vm429, %v1174, %v1182
      %v1189 = vsel %vm429, %v1176, %v1184
      %v1190 = vsel %vm429, %v1178, %v1186
      %v1191 = vsel %vm429, %v1180, %v1172
      %v1192 = vsel %vm429, %v1182, %v1174
      %v1193 = vsel %vm429, %v1184, %v1176
      %v1194 = vsel %vm429, %v1186, %v1178
      %v1195 = vmul.f32 %v1187, %v439
      %v1196 = vmul.f32 %v1191, %v440
      %v1197 = vmul.f32 %v1188, %v439
      %v1198 = vmul.f32 %v1192, %v440
      %v1199 = vmul.f32 %v1189, %v439
      %v1200 = vmul.f32 %v1193, %v440
      %v1201 = vmul.f32 %v1190, %v439
      %v1202 = vmul.f32 %v1194, %v440
      %v1203 = vpack.c.bf16 %v331, %v330
      %v1204 = vpack.c.bf16 %v333, %v332
      %v1205 = vpack.c.bf16 %v335, %v334
      %v1206 = vpack.c.bf16 %v337, %v336
      %v1207 = vpack.c.bf16 %v1164, %v1163
      %v1208 = vpack.c.bf16 %v1166, %v1165
      %v1209 = vpack.c.bf16 %v1168, %v1167
      %v1210 = vpack.c.bf16 %v1170, %v1169
      %v1211 = vpack.c.bf16 %v1196, %v1195
      %v1212 = vpack.c.bf16 %v1198, %v1197
      %v1213 = vpack.c.bf16 %v1200, %v1199
      %v1214 = vpack.c.bf16 %v1202, %v1201
      %v1227 = vunpack.c.l.b16 %v1203
      %v1228 = vunpack.c.h.b16 %v1203
      %v1229 = vunpack.c.l.b16 %v1204
      %v1230 = vunpack.c.h.b16 %v1204
      %v1231 = vunpack.c.l.b16 %v1205
      %v1232 = vunpack.c.h.b16 %v1205
      %v1233 = vunpack.c.l.b16 %v1206
      %v1234 = vunpack.c.h.b16 %v1206
      %v1235 = vunpack.c.l.b16 %v1207
      %v1236 = vunpack.c.h.b16 %v1207
      %v1237 = vunpack.c.l.b16 %v1208
      %v1238 = vunpack.c.h.b16 %v1208
      %v1239 = vunpack.c.l.b16 %v1209
      %v1240 = vunpack.c.h.b16 %v1209
      %v1241 = vunpack.c.l.b16 %v1210
      %v1242 = vunpack.c.h.b16 %v1210
      %v1243 = vunpack.c.l.b16 %v1211
      %v1244 = vunpack.c.h.b16 %v1211
      %v1245 = vunpack.c.l.b16 %v1212
      %v1246 = vunpack.c.h.b16 %v1212
      %v1247 = vunpack.c.l.b16 %v1213
      %v1248 = vunpack.c.h.b16 %v1213
      %v1249 = vunpack.c.l.b16 %v1214
      %v1250 = vunpack.c.h.b16 %v1214
      %v1251 = vpack.c.b16 %v1229, %v1227
      %v1252 = vpack.c.b16 %v1230, %v1228
      %v1253 = vpack.c.b16 %v1233, %v1231
      %v1254 = vpack.c.b16 %v1234, %v1232
      %v1255 = vpack.c.b16 %v1237, %v1235
      %v1256 = vpack.c.b16 %v1238, %v1236
      %v1257 = vpack.c.b16 %v1241, %v1239
      %v1258 = vpack.c.b16 %v1242, %v1240
      %v1259 = vpack.c.b16 %v1245, %v1243
      %v1260 = vpack.c.b16 %v1246, %v1244
      %v1261 = vpack.c.b16 %v1249, %v1247
      %v1262 = vpack.c.b16 %v1250, %v1248
      %1275 = vmatpush.bf16.xpose.msra.mxu0 %v633
      %1276 = vmatpush.bf16.xpose.msra.mxu0 %v631
      %1277 = vmatpush.bf16.xpose.msra.mxu0 %v629
      %1278 = vmatpush.bf16.xpose.msra.mxu0 %v627
      %1279 = vmatpush.bf16.xpose.msra.mxu0 %v625
      %1280 = vmatpush.bf16.xpose.msra.mxu0 %v623
      %1281 = vmatpush.bf16.xpose.msra.mxu0 %v621
      %1282 = vmatpush.bf16.xpose.msra.mxu0 %v619
      %1283 = vmatmul.bf16.gmra.mxu0 %v1251
      %v1284 = vpop.f32.mrf.mxu0
      %v1285 = vadd.f32 0.0, %v1284
      %v1286 = vpop.f32.mrf.mxu0
      %v1287 = vadd.f32 0.0, %v1286
      %1288 = vmatmul.bf16.gmra.mxu0 %v1253
      %v1289 = vpop.f32.mrf.mxu0
      %v1290 = vadd.f32 0.0, %v1289
      %v1291 = vpop.f32.mrf.mxu0
      %v1292 = vadd.f32 0.0, %v1291
      %1293 = vmatmul.bf16.gmra.mxu0 %v1255
      %v1294 = vpop.f32.mrf.mxu0
      %v1295 = vadd.f32 0.0, %v1294
      %v1296 = vpop.f32.mrf.mxu0
      %v1297 = vadd.f32 0.0, %v1296
      %1298 = vmatmul.bf16.gmra.mxu0 %v1257
      %v1299 = vpop.f32.mrf.mxu0
      %v1300 = vadd.f32 0.0, %v1299
      %v1301 = vpop.f32.mrf.mxu0
      %v1302 = vadd.f32 0.0, %v1301
      %1303 = vmatmul.bf16.gmra.mxu0 %v1259
      %v1304 = vpop.f32.mrf.mxu0
      %v1305 = vadd.f32 0.0, %v1304
      %v1306 = vpop.f32.mrf.mxu0
      %v1307 = vadd.f32 0.0, %v1306
      %1308 = vmatmul.bf16.gmra.mxu0 %v1261
      %v1309 = vpop.f32.mrf.mxu0
      %v1310 = vadd.f32 0.0, %v1309
      %v1311 = vpop.f32.mrf.mxu0
      %v1312 = vadd.f32 0.0, %v1311
      %1313 = vdwg.mxu0
      %1314 = vmatpush.bf16.xpose.msra.mxu0 %v634
      %1315 = vmatpush.bf16.xpose.msra.mxu0 %v632
      %1316 = vmatpush.bf16.xpose.msra.mxu0 %v630
      %1317 = vmatpush.bf16.xpose.msra.mxu0 %v628
      %1318 = vmatpush.bf16.xpose.msra.mxu0 %v626
      %1319 = vmatpush.bf16.xpose.msra.mxu0 %v624
      %1320 = vmatpush.bf16.xpose.msra.mxu0 %v622
      %1321 = vmatpush.bf16.xpose.msra.mxu0 %v620
      %1322 = vmatmul.bf16.gmra.mxu0 %v1252
      %v1323 = vpop.f32.mrf.mxu0
      %v1324 = vadd.f32 %v1285, %v1323
      %v1325 = vpop.f32.mrf.mxu0
      %v1326 = vadd.f32 %v1287, %v1325
      %1327 = vmatmul.bf16.gmra.mxu0 %v1254
      %v1328 = vpop.f32.mrf.mxu0
      %v1329 = vadd.f32 %v1290, %v1328
      %v1330 = vpop.f32.mrf.mxu0
      %v1331 = vadd.f32 %v1292, %v1330
      %1332 = vmatmul.bf16.gmra.mxu0 %v1256
      %v1333 = vpop.f32.mrf.mxu0
      %v1334 = vadd.f32 %v1295, %v1333
      %v1335 = vpop.f32.mrf.mxu0
      %v1336 = vadd.f32 %v1297, %v1335
      %1337 = vmatmul.bf16.gmra.mxu0 %v1258
      %v1338 = vpop.f32.mrf.mxu0
      %v1339 = vadd.f32 %v1300, %v1338
      %v1340 = vpop.f32.mrf.mxu0
      %v1341 = vadd.f32 %v1302, %v1340
      %1342 = vmatmul.bf16.gmra.mxu0 %v1260
      %v1343 = vpop.f32.mrf.mxu0
      %v1344 = vadd.f32 %v1305, %v1343
      %v1345 = vpop.f32.mrf.mxu0
      %v1346 = vadd.f32 %v1307, %v1345
      %1347 = vmatmul.bf16.gmra.mxu0 %v1262
      %v1348 = vpop.f32.mrf.mxu0
      %v1349 = vadd.f32 %v1310, %v1348
      %v1350 = vpop.f32.mrf.mxu0
      %v1351 = vadd.f32 %v1312, %v1350
      %1352 = vdwg.mxu0
      %1353 = vmatpush.bf16.xpose.msra.mxu0 %v649
      %1354 = vmatpush.bf16.xpose.msra.mxu0 %v647
      %1355 = vmatpush.bf16.xpose.msra.mxu0 %v645
      %1356 = vmatpush.bf16.xpose.msra.mxu0 %v643
      %1357 = vmatpush.bf16.xpose.msra.mxu0 %v641
      %1358 = vmatpush.bf16.xpose.msra.mxu0 %v639
      %1359 = vmatpush.bf16.xpose.msra.mxu0 %v637
      %1360 = vmatpush.bf16.xpose.msra.mxu0 %v635
      %1361 = vmatmul.bf16.gmra.mxu0 %v1251
      %v1362 = vpop.f32.mrf.mxu0
      %v1363 = vadd.f32 0.0, %v1362
      %v1364 = vpop.f32.mrf.mxu0
      %v1365 = vadd.f32 0.0, %v1364
      %1366 = vmatmul.bf16.gmra.mxu0 %v1253
      %v1367 = vpop.f32.mrf.mxu0
      %v1368 = vadd.f32 0.0, %v1367
      %v1369 = vpop.f32.mrf.mxu0
      %v1370 = vadd.f32 0.0, %v1369
      %1371 = vmatmul.bf16.gmra.mxu0 %v1255
      %v1372 = vpop.f32.mrf.mxu0
      %v1373 = vadd.f32 0.0, %v1372
      %v1374 = vpop.f32.mrf.mxu0
      %v1375 = vadd.f32 0.0, %v1374
      %1376 = vmatmul.bf16.gmra.mxu0 %v1257
      %v1377 = vpop.f32.mrf.mxu0
      %v1378 = vadd.f32 0.0, %v1377
      %v1379 = vpop.f32.mrf.mxu0
      %v1380 = vadd.f32 0.0, %v1379
      %1381 = vmatmul.bf16.gmra.mxu0 %v1259
      %v1382 = vpop.f32.mrf.mxu0
      %v1383 = vadd.f32 0.0, %v1382
      %v1384 = vpop.f32.mrf.mxu0
      %v1385 = vadd.f32 0.0, %v1384
      %1386 = vmatmul.bf16.gmra.mxu0 %v1261
      %v1387 = vpop.f32.mrf.mxu0
      %v1388 = vadd.f32 0.0, %v1387
      %v1389 = vpop.f32.mrf.mxu0
      %v1390 = vadd.f32 0.0, %v1389
      %1391 = vdwg.mxu0
      %1392 = vmatpush.bf16.xpose.msra.mxu0 %v650
      %1393 = vmatpush.bf16.xpose.msra.mxu0 %v648
      %1394 = vmatpush.bf16.xpose.msra.mxu0 %v646
      %1395 = vmatpush.bf16.xpose.msra.mxu0 %v644
      %1396 = vmatpush.bf16.xpose.msra.mxu0 %v642
      %1397 = vmatpush.bf16.xpose.msra.mxu0 %v640
      %1398 = vmatpush.bf16.xpose.msra.mxu0 %v638
      %1399 = vmatpush.bf16.xpose.msra.mxu0 %v636
      %1400 = vmatmul.bf16.gmra.mxu0 %v1252
      %v1401 = vpop.f32.mrf.mxu0
      %v1402 = vadd.f32 %v1363, %v1401
      %v1403 = vpop.f32.mrf.mxu0
      %v1404 = vadd.f32 %v1365, %v1403
      %1405 = vmatmul.bf16.gmra.mxu0 %v1254
      %v1406 = vpop.f32.mrf.mxu0
      %v1407 = vadd.f32 %v1368, %v1406
      %v1408 = vpop.f32.mrf.mxu0
      %v1409 = vadd.f32 %v1370, %v1408
      %1410 = vmatmul.bf16.gmra.mxu0 %v1256
      %v1411 = vpop.f32.mrf.mxu0
      %v1412 = vadd.f32 %v1373, %v1411
      %v1413 = vpop.f32.mrf.mxu0
      %v1414 = vadd.f32 %v1375, %v1413
      %1415 = vmatmul.bf16.gmra.mxu0 %v1258
      %v1416 = vpop.f32.mrf.mxu0
      %v1417 = vadd.f32 %v1378, %v1416
      %v1418 = vpop.f32.mrf.mxu0
      %v1419 = vadd.f32 %v1380, %v1418
      %1420 = vmatmul.bf16.gmra.mxu0 %v1260
      %v1421 = vpop.f32.mrf.mxu0
      %v1422 = vadd.f32 %v1383, %v1421
      %v1423 = vpop.f32.mrf.mxu0
      %v1424 = vadd.f32 %v1385, %v1423
      %1425 = vmatmul.bf16.gmra.mxu0 %v1262
      %v1426 = vpop.f32.mrf.mxu0
      %v1427 = vadd.f32 %v1388, %v1426
      %v1428 = vpop.f32.mrf.mxu0
      %v1429 = vadd.f32 %v1390, %v1428
      %1430 = vdwg.mxu0
      %1431 = vmatpush.bf16.msra.mxu0 %v633
      %1432 = vmatpush.bf16.msra.mxu0 %v631
      %1433 = vmatpush.bf16.msra.mxu0 %v629
      %1434 = vmatpush.bf16.msra.mxu0 %v627
      %1435 = vmatpush.bf16.msra.mxu0 %v625
      %1436 = vmatpush.bf16.msra.mxu0 %v623
      %1437 = vmatpush.bf16.msra.mxu0 %v621
      %1438 = vmatpush.bf16.msra.mxu0 %v619
      %1439 = vmatmul.bf16.gmra.mxu0 %v1251
      %v1440 = vpop.f32.mrf.mxu0
      %v1441 = vadd.f32 0.0, %v1440
      %v1442 = vpop.f32.mrf.mxu0
      %v1443 = vadd.f32 0.0, %v1442
      %1444 = vmatmul.bf16.gmra.mxu0 %v1253
      %v1445 = vpop.f32.mrf.mxu0
      %v1446 = vadd.f32 0.0, %v1445
      %v1447 = vpop.f32.mrf.mxu0
      %v1448 = vadd.f32 0.0, %v1447
      %1449 = vmatmul.bf16.gmra.mxu0 %v1255
      %v1450 = vpop.f32.mrf.mxu0
      %v1451 = vadd.f32 0.0, %v1450
      %v1452 = vpop.f32.mrf.mxu0
      %v1453 = vadd.f32 0.0, %v1452
      %1454 = vmatmul.bf16.gmra.mxu0 %v1257
      %v1455 = vpop.f32.mrf.mxu0
      %v1456 = vadd.f32 0.0, %v1455
      %v1457 = vpop.f32.mrf.mxu0
      %v1458 = vadd.f32 0.0, %v1457
      %1459 = vmatmul.bf16.gmra.mxu0 %v1259
      %v1460 = vpop.f32.mrf.mxu0
      %v1461 = vadd.f32 0.0, %v1460
      %v1462 = vpop.f32.mrf.mxu0
      %v1463 = vadd.f32 0.0, %v1462
      %1464 = vmatmul.bf16.gmra.mxu0 %v1261
      %v1465 = vpop.f32.mrf.mxu0
      %v1466 = vadd.f32 0.0, %v1465
      %v1467 = vpop.f32.mrf.mxu0
      %v1468 = vadd.f32 0.0, %v1467
      %1469 = vdwg.mxu0
      %1470 = vmatpush.bf16.msra.mxu0 %v649
      %1471 = vmatpush.bf16.msra.mxu0 %v647
      %1472 = vmatpush.bf16.msra.mxu0 %v645
      %1473 = vmatpush.bf16.msra.mxu0 %v643
      %1474 = vmatpush.bf16.msra.mxu0 %v641
      %1475 = vmatpush.bf16.msra.mxu0 %v639
      %1476 = vmatpush.bf16.msra.mxu0 %v637
      %1477 = vmatpush.bf16.msra.mxu0 %v635
      %1478 = vmatmul.bf16.gmra.mxu0 %v1252
      %v1479 = vpop.f32.mrf.mxu0
      %v1480 = vadd.f32 %v1441, %v1479
      %v1481 = vpop.f32.mrf.mxu0
      %v1482 = vadd.f32 %v1443, %v1481
      %1483 = vmatmul.bf16.gmra.mxu0 %v1254
      %v1484 = vpop.f32.mrf.mxu0
      %v1485 = vadd.f32 %v1446, %v1484
      %v1486 = vpop.f32.mrf.mxu0
      %v1487 = vadd.f32 %v1448, %v1486
      %1488 = vmatmul.bf16.gmra.mxu0 %v1256
      %v1489 = vpop.f32.mrf.mxu0
      %v1490 = vadd.f32 %v1451, %v1489
      %v1491 = vpop.f32.mrf.mxu0
      %v1492 = vadd.f32 %v1453, %v1491
      %1493 = vmatmul.bf16.gmra.mxu0 %v1258
      %v1494 = vpop.f32.mrf.mxu0
      %v1495 = vadd.f32 %v1456, %v1494
      %v1496 = vpop.f32.mrf.mxu0
      %v1497 = vadd.f32 %v1458, %v1496
      %1498 = vmatmul.bf16.gmra.mxu0 %v1260
      %v1499 = vpop.f32.mrf.mxu0
      %v1500 = vadd.f32 %v1461, %v1499
      %v1501 = vpop.f32.mrf.mxu0
      %v1502 = vadd.f32 %v1463, %v1501
      %1503 = vmatmul.bf16.gmra.mxu0 %v1262
      %v1504 = vpop.f32.mrf.mxu0
      %v1505 = vadd.f32 %v1466, %v1504
      %v1506 = vpop.f32.mrf.mxu0
      %v1507 = vadd.f32 %v1468, %v1506
      %1508 = vdwg.mxu0
      %1509 = vmatpush.bf16.msra.mxu0 %v634
      %1510 = vmatpush.bf16.msra.mxu0 %v632
      %1511 = vmatpush.bf16.msra.mxu0 %v630
      %1512 = vmatpush.bf16.msra.mxu0 %v628
      %1513 = vmatpush.bf16.msra.mxu0 %v626
      %1514 = vmatpush.bf16.msra.mxu0 %v624
      %1515 = vmatpush.bf16.msra.mxu0 %v622
      %1516 = vmatpush.bf16.msra.mxu0 %v620
      %1517 = vmatmul.bf16.gmra.mxu0 %v1251
      %v1518 = vpop.f32.mrf.mxu0
      %v1519 = vadd.f32 0.0, %v1518
      %v1520 = vpop.f32.mrf.mxu0
      %v1521 = vadd.f32 0.0, %v1520
      %1522 = vmatmul.bf16.gmra.mxu0 %v1253
      %v1523 = vpop.f32.mrf.mxu0
      %v1524 = vadd.f32 0.0, %v1523
      %v1525 = vpop.f32.mrf.mxu0
      %v1526 = vadd.f32 0.0, %v1525
      %1527 = vmatmul.bf16.gmra.mxu0 %v1255
      %v1528 = vpop.f32.mrf.mxu0
      %v1529 = vadd.f32 0.0, %v1528
      %v1530 = vpop.f32.mrf.mxu0
      %v1531 = vadd.f32 0.0, %v1530
      %1532 = vmatmul.bf16.gmra.mxu0 %v1257
      %v1533 = vpop.f32.mrf.mxu0
      %v1534 = vadd.f32 0.0, %v1533
      %v1535 = vpop.f32.mrf.mxu0
      %v1536 = vadd.f32 0.0, %v1535
      %1537 = vmatmul.bf16.gmra.mxu0 %v1259
      %v1538 = vpop.f32.mrf.mxu0
      %v1539 = vadd.f32 0.0, %v1538
      %v1540 = vpop.f32.mrf.mxu0
      %v1541 = vadd.f32 0.0, %v1540
      %1542 = vmatmul.bf16.gmra.mxu0 %v1261
      %v1543 = vpop.f32.mrf.mxu0
      %v1544 = vadd.f32 0.0, %v1543
      %v1545 = vpop.f32.mrf.mxu0
      %v1546 = vadd.f32 0.0, %v1545
      %1547 = vdwg.mxu0
      %1548 = vmatpush.bf16.msra.mxu0 %v650
      %1549 = vmatpush.bf16.msra.mxu0 %v648
      %1550 = vmatpush.bf16.msra.mxu0 %v646
      %1551 = vmatpush.bf16.msra.mxu0 %v644
      %1552 = vmatpush.bf16.msra.mxu0 %v642
      %1553 = vmatpush.bf16.msra.mxu0 %v640
      %1554 = vmatpush.bf16.msra.mxu0 %v638
      %1555 = vmatpush.bf16.msra.mxu0 %v636
      %1556 = vmatmul.bf16.gmra.mxu0 %v1252
      %v1557 = vpop.f32.mrf.mxu0
      %v1558 = vadd.f32 %v1519, %v1557
      %v1559 = vpop.f32.mrf.mxu0
      %v1560 = vadd.f32 %v1521, %v1559
      %1561 = vmatmul.bf16.gmra.mxu0 %v1254
      %v1562 = vpop.f32.mrf.mxu0
      %v1563 = vadd.f32 %v1524, %v1562
      %v1564 = vpop.f32.mrf.mxu0
      %v1565 = vadd.f32 %v1526, %v1564
      %1566 = vmatmul.bf16.gmra.mxu0 %v1256
      %v1567 = vpop.f32.mrf.mxu0
      %v1568 = vadd.f32 %v1529, %v1567
      %v1569 = vpop.f32.mrf.mxu0
      %v1570 = vadd.f32 %v1531, %v1569
      %1571 = vmatmul.bf16.gmra.mxu0 %v1258
      %v1572 = vpop.f32.mrf.mxu0
      %v1573 = vadd.f32 %v1534, %v1572
      %v1574 = vpop.f32.mrf.mxu0
      %v1575 = vadd.f32 %v1536, %v1574
      %1576 = vmatmul.bf16.gmra.mxu0 %v1260
      %v1577 = vpop.f32.mrf.mxu0
      %v1578 = vadd.f32 %v1539, %v1577
      %v1579 = vpop.f32.mrf.mxu0
      %v1580 = vadd.f32 %v1541, %v1579
      %1581 = vmatmul.bf16.gmra.mxu0 %v1262
      %v1582 = vpop.f32.mrf.mxu0
      %v1583 = vadd.f32 %v1544, %v1582
      %v1584 = vpop.f32.mrf.mxu0
      %v1585 = vadd.f32 %v1546, %v1584
      %1586 = vdwg.mxu0
      %v1587 = vpack.c.bf16 %v1402, %v1324
      %v1588 = vpack.c.bf16 %v1404, %v1326
      %v1589 = vpack.c.bf16 %v1407, %v1329
      %v1590 = vpack.c.bf16 %v1409, %v1331
      %v1591 = vpack.c.bf16 %v1412, %v1334
      %v1592 = vpack.c.bf16 %v1414, %v1336
      %v1593 = vpack.c.bf16 %v1417, %v1339
      %v1594 = vpack.c.bf16 %v1419, %v1341
      %v1595 = vpack.c.bf16 %v1422, %v1344
      %v1596 = vpack.c.bf16 %v1424, %v1346
      %v1597 = vpack.c.bf16 %v1427, %v1349
      %v1598 = vpack.c.bf16 %v1429, %v1351
      %v1599 = vpack.c.bf16 %v1558, %v1480
      %v1600 = vpack.c.bf16 %v1560, %v1482
      %v1601 = vpack.c.bf16 %v1563, %v1485
      %v1602 = vpack.c.bf16 %v1565, %v1487
      %v1603 = vpack.c.bf16 %v1568, %v1490
      %v1604 = vpack.c.bf16 %v1570, %v1492
      %v1605 = vpack.c.bf16 %v1573, %v1495
      %v1606 = vpack.c.bf16 %v1575, %v1497
      %v1607 = vpack.c.bf16 %v1578, %v1500
      %v1608 = vpack.c.bf16 %v1580, %v1502
      %v1609 = vpack.c.bf16 %v1583, %v1505
      %v1610 = vpack.c.bf16 %v1585, %v1507
      %v1623 = vunpack.c.l.b16 %v1587
      %v1624 = vunpack.c.h.b16 %v1587
      %v1625 = vunpack.c.l.b16 %v1588
      %v1626 = vunpack.c.h.b16 %v1588
      %v1627 = vunpack.c.l.b16 %v1589
      %v1628 = vunpack.c.h.b16 %v1589
      %v1629 = vunpack.c.l.b16 %v1590
      %v1630 = vunpack.c.h.b16 %v1590
      %v1631 = vunpack.c.l.b16 %v1591
      %v1632 = vunpack.c.h.b16 %v1591
      %v1633 = vunpack.c.l.b16 %v1592
      %v1634 = vunpack.c.h.b16 %v1592
      %v1635 = vunpack.c.l.b16 %v1593
      %v1636 = vunpack.c.h.b16 %v1593
      %v1637 = vunpack.c.l.b16 %v1594
      %v1638 = vunpack.c.h.b16 %v1594
      %v1639 = vunpack.c.l.b16 %v1595
      %v1640 = vunpack.c.h.b16 %v1595
      %v1641 = vunpack.c.l.b16 %v1596
      %v1642 = vunpack.c.h.b16 %v1596
      %v1643 = vunpack.c.l.b16 %v1597
      %v1644 = vunpack.c.h.b16 %v1597
      %v1645 = vunpack.c.l.b16 %v1598
      %v1646 = vunpack.c.h.b16 %v1598
      %v1647 = vpack.c.b16 %v1625, %v1623
      %v1648 = vpack.c.b16 %v1626, %v1624
      %v1649 = vpack.c.b16 %v1629, %v1627
      %v1650 = vpack.c.b16 %v1630, %v1628
      %v1651 = vpack.c.b16 %v1633, %v1631
      %v1652 = vpack.c.b16 %v1634, %v1632
      %v1653 = vpack.c.b16 %v1637, %v1635
      %v1654 = vpack.c.b16 %v1638, %v1636
      %v1655 = vpack.c.b16 %v1641, %v1639
      %v1656 = vpack.c.b16 %v1642, %v1640
      %v1657 = vpack.c.b16 %v1645, %v1643
      %v1658 = vpack.c.b16 %v1646, %v1644
      %v1683 = vunpack.c.l.b16 %v1599
      %v1684 = vunpack.c.h.b16 %v1599
      %v1685 = vunpack.c.l.b16 %v1600
      %v1686 = vunpack.c.h.b16 %v1600
      %v1687 = vunpack.c.l.b16 %v1601
      %v1688 = vunpack.c.h.b16 %v1601
      %v1689 = vunpack.c.l.b16 %v1602
      %v1690 = vunpack.c.h.b16 %v1602
      %v1691 = vunpack.c.l.b16 %v1603
      %v1692 = vunpack.c.h.b16 %v1603
      %v1693 = vunpack.c.l.b16 %v1604
      %v1694 = vunpack.c.h.b16 %v1604
      %v1695 = vunpack.c.l.b16 %v1605
      %v1696 = vunpack.c.h.b16 %v1605
      %v1697 = vunpack.c.l.b16 %v1606
      %v1698 = vunpack.c.h.b16 %v1606
      %v1699 = vunpack.c.l.b16 %v1607
      %v1700 = vunpack.c.h.b16 %v1607
      %v1701 = vunpack.c.l.b16 %v1608
      %v1702 = vunpack.c.h.b16 %v1608
      %v1703 = vunpack.c.l.b16 %v1609
      %v1704 = vunpack.c.h.b16 %v1609
      %v1705 = vunpack.c.l.b16 %v1610
      %v1706 = vunpack.c.h.b16 %v1610
      %v1707 = vpack.c.b16 %v1685, %v1683
      %v1708 = vpack.c.b16 %v1686, %v1684
      %v1709 = vpack.c.b16 %v1689, %v1687
      %v1710 = vpack.c.b16 %v1690, %v1688
      %v1711 = vpack.c.b16 %v1693, %v1691
      %v1712 = vpack.c.b16 %v1694, %v1692
      %v1713 = vpack.c.b16 %v1697, %v1695
      %v1714 = vpack.c.b16 %v1698, %v1696
      %v1715 = vpack.c.b16 %v1701, %v1699
      %v1716 = vpack.c.b16 %v1702, %v1700
      %v1717 = vpack.c.b16 %v1705, %v1703
      %v1718 = vpack.c.b16 %v1706, %v1704
      %1731 = vxpose.binary.xlu0.c.b16.start [1/16] %v500, %v499, 128
      %1732 = vxpose.binary.xlu0.c.b16.cont [2/16] %v502, %v501, 128
      %1733 = vxpose.binary.xlu0.c.b16.cont [3/16] %v504, %v503, 128
      %1734 = vxpose.binary.xlu0.c.b16.cont [4/16] %v506, %v505, 128
      %1735 = vxpose.binary.xlu0.c.b16.cont [5/16] %v508, %v507, 128
      %1736 = vxpose.binary.xlu0.c.b16.cont [6/16] %v510, %v509, 128
      %1737 = vxpose.binary.xlu0.c.b16.cont [7/16] %v1056, %v1055, 128
      %1738 = vxpose.binary.xlu0.c.b16.end [8/16] %v1058, %v1057, 128
      %v1739 = vpop.trf.xlu0
      %v1740 = vpop.trf.xlu0
      %v1741 = vpop.trf.xlu0
      %v1742 = vpop.trf.xlu0
      %v1743 = vpop.trf.xlu0
      %v1744 = vpop.trf.xlu0
      %v1745 = vpop.trf.xlu0
      %v1746 = vpop.trf.xlu0
      %v1747 = vpop.trf.xlu0
      %v1748 = vpop.trf.xlu0
      %v1749 = vpop.trf.xlu0
      %v1750 = vpop.trf.xlu0
      %v1751 = vpop.trf.xlu0
      %v1752 = vpop.trf.xlu0
      %v1753 = vpop.trf.xlu0
      %v1754 = vpop.trf.xlu0
      %1755 = vxpose.binary.xlu0.c.b16.start [1/16] %v1060, %v1059, 128
      %1756 = vxpose.binary.xlu0.c.b16.cont [2/16] %v1062, %v1061, 128
      %1757 = vxpose.binary.xlu0.c.b16.cont [3/16] %v1064, %v1063, 128
      %1758 = vxpose.binary.xlu0.c.b16.cont [4/16] %v1066, %v1065, 128
      %1759 = vxpose.binary.xlu0.c.b16.cont [5/16] %v1116, %v1115, 128
      %1760 = vxpose.binary.xlu0.c.b16.cont [6/16] %v1118, %v1117, 128
      %1761 = vxpose.binary.xlu0.c.b16.cont [7/16] %v1120, %v1119, 128
      %1762 = vxpose.binary.xlu0.c.b16.end [8/16] %v1122, %v1121, 128
      %v1763 = vpop.trf.xlu0
      %v1764 = vpop.trf.xlu0
      %v1765 = vpop.trf.xlu0
      %v1766 = vpop.trf.xlu0
      %v1767 = vpop.trf.xlu0
      %v1768 = vpop.trf.xlu0
      %v1769 = vpop.trf.xlu0
      %v1770 = vpop.trf.xlu0
      %v1771 = vpop.trf.xlu0
      %v1772 = vpop.trf.xlu0
      %v1773 = vpop.trf.xlu0
      %v1774 = vpop.trf.xlu0
      %v1775 = vpop.trf.xlu0
      %v1776 = vpop.trf.xlu0
      %v1777 = vpop.trf.xlu0
      %v1778 = vpop.trf.xlu0
      %1779 = vxpose.binary.xlu0.c.b16.start [1/16] %v1124, %v1123, 128
      %1780 = vxpose.binary.xlu0.c.b16.cont [2/16] %v1126, %v1125, 128
      %1781 = vxpose.binary.xlu0.c.b16.cont [3/16] 0, 0, 128
      %1782 = vxpose.binary.xlu0.c.b16.cont [4/16] 0, 0, 128
      %1783 = vxpose.binary.xlu0.c.b16.cont [5/16] 0, 0, 128
      %1784 = vxpose.binary.xlu0.c.b16.cont [6/16] 0, 0, 128
      %1785 = vxpose.binary.xlu0.c.b16.cont [7/16] 0, 0, 128
      %1786 = vxpose.binary.xlu0.c.b16.end [8/16] 0, 0, 128
      %v1787 = vpop.trf.xlu0
      %v1788 = vpop.trf.xlu0
      %v1789 = vpop.trf.xlu0
      %v1790 = vpop.trf.xlu0
      %v1791 = vpop.trf.xlu0
      %v1792 = vpop.trf.xlu0
      %v1793 = vpop.trf.xlu0
      %v1794 = vpop.trf.xlu0
      %v1795 = vpop.trf.xlu0
      %v1796 = vpop.trf.xlu0
      %v1797 = vpop.trf.xlu0
      %v1798 = vpop.trf.xlu0
      %v1799 = vpop.trf.xlu0
      %v1800 = vpop.trf.xlu0
      %v1801 = vpop.trf.xlu0
      %v1802 = vpop.trf.xlu0
      %vm1803 = vcmask 261120
      %v1805 = vsel %vm1803, %v1787, 0
      %v1808 = vsel %vm1803, %v1789, 0
      %v1811 = vsel %vm1803, %v1791, 0
      %v1814 = vsel %vm1803, %v1793, 0
      %v1817 = vsel %vm1803, %v1795, 0
      %v1820 = vsel %vm1803, %v1797, 0
      %v1823 = vsel %vm1803, %v1799, 0
      %v1826 = vsel %vm1803, %v1801, 0
      %v1829 = vsel %vm1803, %v1788, 0
      %v1832 = vsel %vm1803, %v1790, 0
      %v1835 = vsel %vm1803, %v1792, 0
      %v1838 = vsel %vm1803, %v1794, 0
      %v1841 = vsel %vm1803, %v1796, 0
      %v1844 = vsel %vm1803, %v1798, 0
      %v1847 = vsel %vm1803, %v1800, 0
      %v1850 = vsel %vm1803, %v1802, 0
      %1852 = vmatpush.bf16.msra.mxu0 %v1649
      %1853 = vmatpush.bf16.msra.mxu0 %v1647
      %1854 = vmatpush.bf16.msra.mxu0 %v1261
      %1855 = vmatpush.bf16.msra.mxu0 %v1259
      %1856 = vmatpush.bf16.msra.mxu0 %v1257
      %1857 = vmatpush.bf16.msra.mxu0 %v1255
      %1858 = vmatpush.bf16.msra.mxu0 %v1253
      %1859 = vmatpush.bf16.msra.mxu0 %v1251
      %1860 = vmatmul.bf16.gmra.mxu0 %v1739
      %v1861 = vpop.f32.mrf.mxu0
      %v1862 = vadd.f32 0.0, %v1861
      %v1863 = vpop.f32.mrf.mxu0
      %v1864 = vadd.f32 0.0, %v1863
      %1865 = vmatmul.bf16.gmra.mxu0 %v1741
      %v1866 = vpop.f32.mrf.mxu0
      %v1867 = vadd.f32 0.0, %v1866
      %v1868 = vpop.f32.mrf.mxu0
      %v1869 = vadd.f32 0.0, %v1868
      %1870 = vmatmul.bf16.gmra.mxu0 %v1743
      %v1871 = vpop.f32.mrf.mxu0
      %v1872 = vadd.f32 0.0, %v1871
      %v1873 = vpop.f32.mrf.mxu0
      %v1874 = vadd.f32 0.0, %v1873
      %1875 = vmatmul.bf16.gmra.mxu0 %v1745
      %v1876 = vpop.f32.mrf.mxu0
      %v1877 = vadd.f32 0.0, %v1876
      %v1878 = vpop.f32.mrf.mxu0
      %v1879 = vadd.f32 0.0, %v1878
      %1880 = vmatmul.bf16.gmra.mxu0 %v1747
      %v1881 = vpop.f32.mrf.mxu0
      %v1882 = vadd.f32 0.0, %v1881
      %v1883 = vpop.f32.mrf.mxu0
      %v1884 = vadd.f32 0.0, %v1883
      %1885 = vmatmul.bf16.gmra.mxu0 %v1749
      %v1886 = vpop.f32.mrf.mxu0
      %v1887 = vadd.f32 0.0, %v1886
      %v1888 = vpop.f32.mrf.mxu0
      %v1889 = vadd.f32 0.0, %v1888
      %1890 = vmatmul.bf16.gmra.mxu0 %v1751
      %v1891 = vpop.f32.mrf.mxu0
      %v1892 = vadd.f32 0.0, %v1891
      %v1893 = vpop.f32.mrf.mxu0
      %v1894 = vadd.f32 0.0, %v1893
      %1895 = vmatmul.bf16.gmra.mxu0 %v1753
      %v1896 = vpop.f32.mrf.mxu0
      %v1897 = vadd.f32 0.0, %v1896
      %v1898 = vpop.f32.mrf.mxu0
      %v1899 = vadd.f32 0.0, %v1898
      %1900 = vmatmul.bf16.gmra.mxu0 %v1740
      %v1901 = vpop.f32.mrf.mxu0
      %v1902 = vadd.f32 0.0, %v1901
      %v1903 = vpop.f32.mrf.mxu0
      %v1904 = vadd.f32 0.0, %v1903
      %1905 = vmatmul.bf16.gmra.mxu0 %v1742
      %v1906 = vpop.f32.mrf.mxu0
      %v1907 = vadd.f32 0.0, %v1906
      %v1908 = vpop.f32.mrf.mxu0
      %v1909 = vadd.f32 0.0, %v1908
      %1910 = vmatmul.bf16.gmra.mxu0 %v1744
      %v1911 = vpop.f32.mrf.mxu0
      %v1912 = vadd.f32 0.0, %v1911
      %v1913 = vpop.f32.mrf.mxu0
      %v1914 = vadd.f32 0.0, %v1913
      %1915 = vmatmul.bf16.gmra.mxu0 %v1746
      %v1916 = vpop.f32.mrf.mxu0
      %v1917 = vadd.f32 0.0, %v1916
      %v1918 = vpop.f32.mrf.mxu0
      %v1919 = vadd.f32 0.0, %v1918
      %1920 = vmatmul.bf16.gmra.mxu0 %v1748
      %v1921 = vpop.f32.mrf.mxu0
      %v1922 = vadd.f32 0.0, %v1921
      %v1923 = vpop.f32.mrf.mxu0
      %v1924 = vadd.f32 0.0, %v1923
      %1925 = vmatmul.bf16.gmra.mxu0 %v1750
      %v1926 = vpop.f32.mrf.mxu0
      %v1927 = vadd.f32 0.0, %v1926
      %v1928 = vpop.f32.mrf.mxu0
      %v1929 = vadd.f32 0.0, %v1928
      %1930 = vmatmul.bf16.gmra.mxu0 %v1752
      %v1931 = vpop.f32.mrf.mxu0
      %v1932 = vadd.f32 0.0, %v1931
      %v1933 = vpop.f32.mrf.mxu0
      %v1934 = vadd.f32 0.0, %v1933
      %1935 = vmatmul.bf16.gmra.mxu0 %v1754
      %v1936 = vpop.f32.mrf.mxu0
      %v1937 = vadd.f32 0.0, %v1936
      %v1938 = vpop.f32.mrf.mxu0
      %v1939 = vadd.f32 0.0, %v1938
      %1940 = vdwg.mxu0
      %1941 = vmatpush.bf16.msra.mxu0 %v1713
      %1942 = vmatpush.bf16.msra.mxu0 %v1711
      %1943 = vmatpush.bf16.msra.mxu0 %v1709
      %1944 = vmatpush.bf16.msra.mxu0 %v1707
      %1945 = vmatpush.bf16.msra.mxu0 %v1657
      %1946 = vmatpush.bf16.msra.mxu0 %v1655
      %1947 = vmatpush.bf16.msra.mxu0 %v1653
      %1948 = vmatpush.bf16.msra.mxu0 %v1651
      %1949 = vmatmul.bf16.gmra.mxu0 %v1763
      %v1950 = vpop.f32.mrf.mxu0
      %v1951 = vadd.f32 %v1862, %v1950
      %v1952 = vpop.f32.mrf.mxu0
      %v1953 = vadd.f32 %v1864, %v1952
      %1954 = vmatmul.bf16.gmra.mxu0 %v1765
      %v1955 = vpop.f32.mrf.mxu0
      %v1956 = vadd.f32 %v1867, %v1955
      %v1957 = vpop.f32.mrf.mxu0
      %v1958 = vadd.f32 %v1869, %v1957
      %1959 = vmatmul.bf16.gmra.mxu0 %v1767
      %v1960 = vpop.f32.mrf.mxu0
      %v1961 = vadd.f32 %v1872, %v1960
      %v1962 = vpop.f32.mrf.mxu0
      %v1963 = vadd.f32 %v1874, %v1962
      %1964 = vmatmul.bf16.gmra.mxu0 %v1769
      %v1965 = vpop.f32.mrf.mxu0
      %v1966 = vadd.f32 %v1877, %v1965
      %v1967 = vpop.f32.mrf.mxu0
      %v1968 = vadd.f32 %v1879, %v1967
      %1969 = vmatmul.bf16.gmra.mxu0 %v1771
      %v1970 = vpop.f32.mrf.mxu0
      %v1971 = vadd.f32 %v1882, %v1970
      %v1972 = vpop.f32.mrf.mxu0
      %v1973 = vadd.f32 %v1884, %v1972
      %1974 = vmatmul.bf16.gmra.mxu0 %v1773
      %v1975 = vpop.f32.mrf.mxu0
      %v1976 = vadd.f32 %v1887, %v1975
      %v1977 = vpop.f32.mrf.mxu0
      %v1978 = vadd.f32 %v1889, %v1977
      %1979 = vmatmul.bf16.gmra.mxu0 %v1775
      %v1980 = vpop.f32.mrf.mxu0
      %v1981 = vadd.f32 %v1892, %v1980
      %v1982 = vpop.f32.mrf.mxu0
      %v1983 = vadd.f32 %v1894, %v1982
      %1984 = vmatmul.bf16.gmra.mxu0 %v1777
      %v1985 = vpop.f32.mrf.mxu0
      %v1986 = vadd.f32 %v1897, %v1985
      %v1987 = vpop.f32.mrf.mxu0
      %v1988 = vadd.f32 %v1899, %v1987
      %1989 = vmatmul.bf16.gmra.mxu0 %v1764
      %v1990 = vpop.f32.mrf.mxu0
      %v1991 = vadd.f32 %v1902, %v1990
      %v1992 = vpop.f32.mrf.mxu0
      %v1993 = vadd.f32 %v1904, %v1992
      %1994 = vmatmul.bf16.gmra.mxu0 %v1766
      %v1995 = vpop.f32.mrf.mxu0
      %v1996 = vadd.f32 %v1907, %v1995
      %v1997 = vpop.f32.mrf.mxu0
      %v1998 = vadd.f32 %v1909, %v1997
      %1999 = vmatmul.bf16.gmra.mxu0 %v1768
      %v2000 = vpop.f32.mrf.mxu0
      %v2001 = vadd.f32 %v1912, %v2000
      %v2002 = vpop.f32.mrf.mxu0
      %v2003 = vadd.f32 %v1914, %v2002
      %2004 = vmatmul.bf16.gmra.mxu0 %v1770
      %v2005 = vpop.f32.mrf.mxu0
      %v2006 = vadd.f32 %v1917, %v2005
      %v2007 = vpop.f32.mrf.mxu0
      %v2008 = vadd.f32 %v1919, %v2007
      %2009 = vmatmul.bf16.gmra.mxu0 %v1772
      %v2010 = vpop.f32.mrf.mxu0
      %v2011 = vadd.f32 %v1922, %v2010
      %v2012 = vpop.f32.mrf.mxu0
      %v2013 = vadd.f32 %v1924, %v2012
      %2014 = vmatmul.bf16.gmra.mxu0 %v1774
      %v2015 = vpop.f32.mrf.mxu0
      %v2016 = vadd.f32 %v1927, %v2015
      %v2017 = vpop.f32.mrf.mxu0
      %v2018 = vadd.f32 %v1929, %v2017
      %2019 = vmatmul.bf16.gmra.mxu0 %v1776
      %v2020 = vpop.f32.mrf.mxu0
      %v2021 = vadd.f32 %v1932, %v2020
      %v2022 = vpop.f32.mrf.mxu0
      %v2023 = vadd.f32 %v1934, %v2022
      %2024 = vmatmul.bf16.gmra.mxu0 %v1778
      %v2025 = vpop.f32.mrf.mxu0
      %v2026 = vadd.f32 %v1937, %v2025
      %v2027 = vpop.f32.mrf.mxu0
      %v2028 = vadd.f32 %v1939, %v2027
      %2029 = vdwg.mxu0
      %2030 = vmatpush.bf16.msra.mxu0 0
      %2031 = vmatpush.bf16.msra.mxu0 0
      %2032 = vmatpush.bf16.msra.mxu0 0
      %2033 = vmatpush.bf16.msra.mxu0 0
      %2034 = vmatpush.bf16.msra.mxu0 0
      %2035 = vmatpush.bf16.msra.mxu0 0
      %2036 = vmatpush.bf16.msra.mxu0 %v1717
      %2037 = vmatpush.bf16.msra.mxu0 %v1715
      %2038 = vmatmul.bf16.gmra.mxu0 %v1805
      %v2039 = vpop.f32.mrf.mxu0
      %v2040 = vadd.f32 %v1951, %v2039
      %v2041 = vpop.f32.mrf.mxu0
      %v2042 = vadd.f32 %v1953, %v2041
      %2043 = vmatmul.bf16.gmra.mxu0 %v1808
      %v2044 = vpop.f32.mrf.mxu0
      %v2045 = vadd.f32 %v1956, %v2044
      %v2046 = vpop.f32.mrf.mxu0
      %v2047 = vadd.f32 %v1958, %v2046
      %2048 = vmatmul.bf16.gmra.mxu0 %v1811
      %v2049 = vpop.f32.mrf.mxu0
      %v2050 = vadd.f32 %v1961, %v2049
      %v2051 = vpop.f32.mrf.mxu0
      %v2052 = vadd.f32 %v1963, %v2051
      %2053 = vmatmul.bf16.gmra.mxu0 %v1814
      %v2054 = vpop.f32.mrf.mxu0
      %v2055 = vadd.f32 %v1966, %v2054
      %v2056 = vpop.f32.mrf.mxu0
      %v2057 = vadd.f32 %v1968, %v2056
      %2058 = vmatmul.bf16.gmra.mxu0 %v1817
      %v2059 = vpop.f32.mrf.mxu0
      %v2060 = vadd.f32 %v1971, %v2059
      %v2061 = vpop.f32.mrf.mxu0
      %v2062 = vadd.f32 %v1973, %v2061
      %2063 = vmatmul.bf16.gmra.mxu0 %v1820
      %v2064 = vpop.f32.mrf.mxu0
      %v2065 = vadd.f32 %v1976, %v2064
      %v2066 = vpop.f32.mrf.mxu0
      %v2067 = vadd.f32 %v1978, %v2066
      %2068 = vmatmul.bf16.gmra.mxu0 %v1823
      %v2069 = vpop.f32.mrf.mxu0
      %v2070 = vadd.f32 %v1981, %v2069
      %v2071 = vpop.f32.mrf.mxu0
      %v2072 = vadd.f32 %v1983, %v2071
      %2073 = vmatmul.bf16.gmra.mxu0 %v1826
      %v2074 = vpop.f32.mrf.mxu0
      %v2075 = vadd.f32 %v1986, %v2074
      %v2076 = vpop.f32.mrf.mxu0
      %v2077 = vadd.f32 %v1988, %v2076
      %2078 = vmatmul.bf16.gmra.mxu0 %v1829
      %v2079 = vpop.f32.mrf.mxu0
      %v2080 = vadd.f32 %v1991, %v2079
      %v2081 = vpop.f32.mrf.mxu0
      %v2082 = vadd.f32 %v1993, %v2081
      %2083 = vmatmul.bf16.gmra.mxu0 %v1832
      %v2084 = vpop.f32.mrf.mxu0
      %v2085 = vadd.f32 %v1996, %v2084
      %v2086 = vpop.f32.mrf.mxu0
      %v2087 = vadd.f32 %v1998, %v2086
      %2088 = vmatmul.bf16.gmra.mxu0 %v1835
      %v2089 = vpop.f32.mrf.mxu0
      %v2090 = vadd.f32 %v2001, %v2089
      %v2091 = vpop.f32.mrf.mxu0
      %v2092 = vadd.f32 %v2003, %v2091
      %2093 = vmatmul.bf16.gmra.mxu0 %v1838
      %v2094 = vpop.f32.mrf.mxu0
      %v2095 = vadd.f32 %v2006, %v2094
      %v2096 = vpop.f32.mrf.mxu0
      %v2097 = vadd.f32 %v2008, %v2096
      %2098 = vmatmul.bf16.gmra.mxu0 %v1841
      %v2099 = vpop.f32.mrf.mxu0
      %v2100 = vadd.f32 %v2011, %v2099
      %v2101 = vpop.f32.mrf.mxu0
      %v2102 = vadd.f32 %v2013, %v2101
      %2103 = vmatmul.bf16.gmra.mxu0 %v1844
      %v2104 = vpop.f32.mrf.mxu0
      %v2105 = vadd.f32 %v2016, %v2104
      %v2106 = vpop.f32.mrf.mxu0
      %v2107 = vadd.f32 %v2018, %v2106
      %2108 = vmatmul.bf16.gmra.mxu0 %v1847
      %v2109 = vpop.f32.mrf.mxu0
      %v2110 = vadd.f32 %v2021, %v2109
      %v2111 = vpop.f32.mrf.mxu0
      %v2112 = vadd.f32 %v2023, %v2111
      %2113 = vmatmul.bf16.gmra.mxu0 %v1850
      %v2114 = vpop.f32.mrf.mxu0
      %v2115 = vadd.f32 %v2026, %v2114
      %v2116 = vpop.f32.mrf.mxu0
      %v2117 = vadd.f32 %v2028, %v2116
      %2118 = vdwg.mxu0
      %2119 = vmatpush.bf16.msra.mxu0 %v1650
      %2120 = vmatpush.bf16.msra.mxu0 %v1648
      %2121 = vmatpush.bf16.msra.mxu0 %v1262
      %2122 = vmatpush.bf16.msra.mxu0 %v1260
      %2123 = vmatpush.bf16.msra.mxu0 %v1258
      %2124 = vmatpush.bf16.msra.mxu0 %v1256
      %2125 = vmatpush.bf16.msra.mxu0 %v1254
      %2126 = vmatpush.bf16.msra.mxu0 %v1252
      %2127 = vmatmul.bf16.gmra.mxu0 %v1739
      %v2128 = vpop.f32.mrf.mxu0
      %v2129 = vadd.f32 0.0, %v2128
      %v2130 = vpop.f32.mrf.mxu0
      %v2131 = vadd.f32 0.0, %v2130
      %2132 = vmatmul.bf16.gmra.mxu0 %v1741
      %v2133 = vpop.f32.mrf.mxu0
      %v2134 = vadd.f32 0.0, %v2133
      %v2135 = vpop.f32.mrf.mxu0
      %v2136 = vadd.f32 0.0, %v2135
      %2137 = vmatmul.bf16.gmra.mxu0 %v1743
      %v2138 = vpop.f32.mrf.mxu0
      %v2139 = vadd.f32 0.0, %v2138
      %v2140 = vpop.f32.mrf.mxu0
      %v2141 = vadd.f32 0.0, %v2140
      %2142 = vmatmul.bf16.gmra.mxu0 %v1745
      %v2143 = vpop.f32.mrf.mxu0
      %v2144 = vadd.f32 0.0, %v2143
      %v2145 = vpop.f32.mrf.mxu0
      %v2146 = vadd.f32 0.0, %v2145
      %2147 = vmatmul.bf16.gmra.mxu0 %v1747
      %v2148 = vpop.f32.mrf.mxu0
      %v2149 = vadd.f32 0.0, %v2148
      %v2150 = vpop.f32.mrf.mxu0
      %v2151 = vadd.f32 0.0, %v2150
      %2152 = vmatmul.bf16.gmra.mxu0 %v1749
      %v2153 = vpop.f32.mrf.mxu0
      %v2154 = vadd.f32 0.0, %v2153
      %v2155 = vpop.f32.mrf.mxu0
      %v2156 = vadd.f32 0.0, %v2155
      %2157 = vmatmul.bf16.gmra.mxu0 %v1751
      %v2158 = vpop.f32.mrf.mxu0
      %v2159 = vadd.f32 0.0, %v2158
      %v2160 = vpop.f32.mrf.mxu0
      %v2161 = vadd.f32 0.0, %v2160
      %2162 = vmatmul.bf16.gmra.mxu0 %v1753
      %v2163 = vpop.f32.mrf.mxu0
      %v2164 = vadd.f32 0.0, %v2163
      %v2165 = vpop.f32.mrf.mxu0
      %v2166 = vadd.f32 0.0, %v2165
      %2167 = vmatmul.bf16.gmra.mxu0 %v1740
      %v2168 = vpop.f32.mrf.mxu0
      %v2169 = vadd.f32 0.0, %v2168
      %v2170 = vpop.f32.mrf.mxu0
      %v2171 = vadd.f32 0.0, %v2170
      %2172 = vmatmul.bf16.gmra.mxu0 %v1742
      %v2173 = vpop.f32.mrf.mxu0
      %v2174 = vadd.f32 0.0, %v2173
      %v2175 = vpop.f32.mrf.mxu0
      %v2176 = vadd.f32 0.0, %v2175
      %2177 = vmatmul.bf16.gmra.mxu0 %v1744
      %v2178 = vpop.f32.mrf.mxu0
      %v2179 = vadd.f32 0.0, %v2178
      %v2180 = vpop.f32.mrf.mxu0
      %v2181 = vadd.f32 0.0, %v2180
      %2182 = vmatmul.bf16.gmra.mxu0 %v1746
      %v2183 = vpop.f32.mrf.mxu0
      %v2184 = vadd.f32 0.0, %v2183
      %v2185 = vpop.f32.mrf.mxu0
      %v2186 = vadd.f32 0.0, %v2185
      %2187 = vmatmul.bf16.gmra.mxu0 %v1748
      %v2188 = vpop.f32.mrf.mxu0
      %v2189 = vadd.f32 0.0, %v2188
      %v2190 = vpop.f32.mrf.mxu0
      %v2191 = vadd.f32 0.0, %v2190
      %2192 = vmatmul.bf16.gmra.mxu0 %v1750
      %v2193 = vpop.f32.mrf.mxu0
      %v2194 = vadd.f32 0.0, %v2193
      %v2195 = vpop.f32.mrf.mxu0
      %v2196 = vadd.f32 0.0, %v2195
      %2197 = vmatmul.bf16.gmra.mxu0 %v1752
      %v2198 = vpop.f32.mrf.mxu0
      %v2199 = vadd.f32 0.0, %v2198
      %v2200 = vpop.f32.mrf.mxu0
      %v2201 = vadd.f32 0.0, %v2200
      %2202 = vmatmul.bf16.gmra.mxu0 %v1754
      %v2203 = vpop.f32.mrf.mxu0
      %v2204 = vadd.f32 0.0, %v2203
      %v2205 = vpop.f32.mrf.mxu0
      %v2206 = vadd.f32 0.0, %v2205
      %2207 = vdwg.mxu0
      %2208 = vmatpush.bf16.msra.mxu0 %v1714
      %2209 = vmatpush.bf16.msra.mxu0 %v1712
      %2210 = vmatpush.bf16.msra.mxu0 %v1710
      %2211 = vmatpush.bf16.msra.mxu0 %v1708
      %2212 = vmatpush.bf16.msra.mxu0 %v1658
      %2213 = vmatpush.bf16.msra.mxu0 %v1656
      %2214 = vmatpush.bf16.msra.mxu0 %v1654
      %2215 = vmatpush.bf16.msra.mxu0 %v1652
      %2216 = vmatmul.bf16.gmra.mxu0 %v1763
      %v2217 = vpop.f32.mrf.mxu0
      %v2218 = vadd.f32 %v2129, %v2217
      %v2219 = vpop.f32.mrf.mxu0
      %v2220 = vadd.f32 %v2131, %v2219
      %2221 = vmatmul.bf16.gmra.mxu0 %v1765
      %v2222 = vpop.f32.mrf.mxu0
      %v2223 = vadd.f32 %v2134, %v2222
      %v2224 = vpop.f32.mrf.mxu0
      %v2225 = vadd.f32 %v2136, %v2224
      %2226 = vmatmul.bf16.gmra.mxu0 %v1767
      %v2227 = vpop.f32.mrf.mxu0
      %v2228 = vadd.f32 %v2139, %v2227
      %v2229 = vpop.f32.mrf.mxu0
      %v2230 = vadd.f32 %v2141, %v2229
      %2231 = vmatmul.bf16.gmra.mxu0 %v1769
      %v2232 = vpop.f32.mrf.mxu0
      %v2233 = vadd.f32 %v2144, %v2232
      %v2234 = vpop.f32.mrf.mxu0
      %v2235 = vadd.f32 %v2146, %v2234
      %2236 = vmatmul.bf16.gmra.mxu0 %v1771
      %v2237 = vpop.f32.mrf.mxu0
      %v2238 = vadd.f32 %v2149, %v2237
      %v2239 = vpop.f32.mrf.mxu0
      %v2240 = vadd.f32 %v2151, %v2239
      %2241 = vmatmul.bf16.gmra.mxu0 %v1773
      %v2242 = vpop.f32.mrf.mxu0
      %v2243 = vadd.f32 %v2154, %v2242
      %v2244 = vpop.f32.mrf.mxu0
      %v2245 = vadd.f32 %v2156, %v2244
      %2246 = vmatmul.bf16.gmra.mxu0 %v1775
      %v2247 = vpop.f32.mrf.mxu0
      %v2248 = vadd.f32 %v2159, %v2247
      %v2249 = vpop.f32.mrf.mxu0
      %v2250 = vadd.f32 %v2161, %v2249
      %2251 = vmatmul.bf16.gmra.mxu0 %v1777
      %v2252 = vpop.f32.mrf.mxu0
      %v2253 = vadd.f32 %v2164, %v2252
      %v2254 = vpop.f32.mrf.mxu0
      %v2255 = vadd.f32 %v2166, %v2254
      %2256 = vmatmul.bf16.gmra.mxu0 %v1764
      %v2257 = vpop.f32.mrf.mxu0
      %v2258 = vadd.f32 %v2169, %v2257
      %v2259 = vpop.f32.mrf.mxu0
      %v2260 = vadd.f32 %v2171, %v2259
      %2261 = vmatmul.bf16.gmra.mxu0 %v1766
      %v2262 = vpop.f32.mrf.mxu0
      %v2263 = vadd.f32 %v2174, %v2262
      %v2264 = vpop.f32.mrf.mxu0
      %v2265 = vadd.f32 %v2176, %v2264
      %2266 = vmatmul.bf16.gmra.mxu0 %v1768
      %v2267 = vpop.f32.mrf.mxu0
      %v2268 = vadd.f32 %v2179, %v2267
      %v2269 = vpop.f32.mrf.mxu0
      %v2270 = vadd.f32 %v2181, %v2269
      %2271 = vmatmul.bf16.gmra.mxu0 %v1770
      %v2272 = vpop.f32.mrf.mxu0
      %v2273 = vadd.f32 %v2184, %v2272
      %v2274 = vpop.f32.mrf.mxu0
      %v2275 = vadd.f32 %v2186, %v2274
      %2276 = vmatmul.bf16.gmra.mxu0 %v1772
      %v2277 = vpop.f32.mrf.mxu0
      %v2278 = vadd.f32 %v2189, %v2277
      %v2279 = vpop.f32.mrf.mxu0
      %v2280 = vadd.f32 %v2191, %v2279
      %2281 = vmatmul.bf16.gmra.mxu0 %v1774
      %v2282 = vpop.f32.mrf.mxu0
      %v2283 = vadd.f32 %v2194, %v2282
      %v2284 = vpop.f32.mrf.mxu0
      %v2285 = vadd.f32 %v2196, %v2284
      %2286 = vmatmul.bf16.gmra.mxu0 %v1776
      %v2287 = vpop.f32.mrf.mxu0
      %v2288 = vadd.f32 %v2199, %v2287
      %v2289 = vpop.f32.mrf.mxu0
      %v2290 = vadd.f32 %v2201, %v2289
      %2291 = vmatmul.bf16.gmra.mxu0 %v1778
      %v2292 = vpop.f32.mrf.mxu0
      %v2293 = vadd.f32 %v2204, %v2292
      %v2294 = vpop.f32.mrf.mxu0
      %v2295 = vadd.f32 %v2206, %v2294
      %2296 = vdwg.mxu0
      %2297 = vmatpush.bf16.msra.mxu0 0
      %2298 = vmatpush.bf16.msra.mxu0 0
      %2299 = vmatpush.bf16.msra.mxu0 0
      %2300 = vmatpush.bf16.msra.mxu0 0
      %2301 = vmatpush.bf16.msra.mxu0 0
      %2302 = vmatpush.bf16.msra.mxu0 0
      %2303 = vmatpush.bf16.msra.mxu0 %v1718
      %2304 = vmatpush.bf16.msra.mxu0 %v1716
      %2305 = vmatmul.bf16.gmra.mxu0 %v1805
      %v2306 = vpop.f32.mrf.mxu0
      %v2307 = vadd.f32 %v2218, %v2306
      %v2308 = vpop.f32.mrf.mxu0
      %v2309 = vadd.f32 %v2220, %v2308
      %2310 = vmatmul.bf16.gmra.mxu0 %v1808
      %v2311 = vpop.f32.mrf.mxu0
      %v2312 = vadd.f32 %v2223, %v2311
      %v2313 = vpop.f32.mrf.mxu0
      %v2314 = vadd.f32 %v2225, %v2313
      %2315 = vmatmul.bf16.gmra.mxu0 %v1811
      %v2316 = vpop.f32.mrf.mxu0
      %v2317 = vadd.f32 %v2228, %v2316
      %v2318 = vpop.f32.mrf.mxu0
      %v2319 = vadd.f32 %v2230, %v2318
      %2320 = vmatmul.bf16.gmra.mxu0 %v1814
      %v2321 = vpop.f32.mrf.mxu0
      %v2322 = vadd.f32 %v2233, %v2321
      %v2323 = vpop.f32.mrf.mxu0
      %v2324 = vadd.f32 %v2235, %v2323
      %2325 = vmatmul.bf16.gmra.mxu0 %v1817
      %v2326 = vpop.f32.mrf.mxu0
      %v2327 = vadd.f32 %v2238, %v2326
      %v2328 = vpop.f32.mrf.mxu0
      %v2329 = vadd.f32 %v2240, %v2328
      %2330 = vmatmul.bf16.gmra.mxu0 %v1820
      %v2331 = vpop.f32.mrf.mxu0
      %v2332 = vadd.f32 %v2243, %v2331
      %v2333 = vpop.f32.mrf.mxu0
      %v2334 = vadd.f32 %v2245, %v2333
      %2335 = vmatmul.bf16.gmra.mxu0 %v1823
      %v2336 = vpop.f32.mrf.mxu0
      %v2337 = vadd.f32 %v2248, %v2336
      %v2338 = vpop.f32.mrf.mxu0
      %v2339 = vadd.f32 %v2250, %v2338
      %2340 = vmatmul.bf16.gmra.mxu0 %v1826
      %v2341 = vpop.f32.mrf.mxu0
      %v2342 = vadd.f32 %v2253, %v2341
      %v2343 = vpop.f32.mrf.mxu0
      %v2344 = vadd.f32 %v2255, %v2343
      %2345 = vmatmul.bf16.gmra.mxu0 %v1829
      %v2346 = vpop.f32.mrf.mxu0
      %v2347 = vadd.f32 %v2258, %v2346
      %v2348 = vpop.f32.mrf.mxu0
      %v2349 = vadd.f32 %v2260, %v2348
      %2350 = vmatmul.bf16.gmra.mxu0 %v1832
      %v2351 = vpop.f32.mrf.mxu0
      %v2352 = vadd.f32 %v2263, %v2351
      %v2353 = vpop.f32.mrf.mxu0
      %v2354 = vadd.f32 %v2265, %v2353
      %2355 = vmatmul.bf16.gmra.mxu0 %v1835
      %v2356 = vpop.f32.mrf.mxu0
      %v2357 = vadd.f32 %v2268, %v2356
      %v2358 = vpop.f32.mrf.mxu0
      %v2359 = vadd.f32 %v2270, %v2358
      %2360 = vmatmul.bf16.gmra.mxu0 %v1838
      %v2361 = vpop.f32.mrf.mxu0
      %v2362 = vadd.f32 %v2273, %v2361
      %v2363 = vpop.f32.mrf.mxu0
      %v2364 = vadd.f32 %v2275, %v2363
      %2365 = vmatmul.bf16.gmra.mxu0 %v1841
      %v2366 = vpop.f32.mrf.mxu0
      %v2367 = vadd.f32 %v2278, %v2366
      %v2368 = vpop.f32.mrf.mxu0
      %v2369 = vadd.f32 %v2280, %v2368
      %2370 = vmatmul.bf16.gmra.mxu0 %v1844
      %v2371 = vpop.f32.mrf.mxu0
      %v2372 = vadd.f32 %v2283, %v2371
      %v2373 = vpop.f32.mrf.mxu0
      %v2374 = vadd.f32 %v2285, %v2373
      %2375 = vmatmul.bf16.gmra.mxu0 %v1847
      %v2376 = vpop.f32.mrf.mxu0
      %v2377 = vadd.f32 %v2288, %v2376
      %v2378 = vpop.f32.mrf.mxu0
      %v2379 = vadd.f32 %v2290, %v2378
      %2380 = vmatmul.bf16.gmra.mxu0 %v1850
      %v2381 = vpop.f32.mrf.mxu0
      %v2382 = vadd.f32 %v2293, %v2381
      %v2383 = vpop.f32.mrf.mxu0
      %v2384 = vadd.f32 %v2295, %v2383
      %2385 = vdwg.mxu0
      %v2386 = vmul.f32 %v247, 10.0
      %v2388 = vperm.slane %v2386, 0
      %v2389 = vperm.slane %v2386, 1
      %v2392 = vmul.f32 %v2040, %v2388
      %v2393 = vmul.f32 %v2307, %v2389
      %v2394 = vmul.f32 %v2042, %v2388
      %v2395 = vmul.f32 %v2309, %v2389
      %v2396 = vmul.f32 %v2045, %v2388
      %v2397 = vmul.f32 %v2312, %v2389
      %v2398 = vmul.f32 %v2047, %v2388
      %v2399 = vmul.f32 %v2314, %v2389
      %v2400 = vmul.f32 %v2050, %v2388
      %v2401 = vmul.f32 %v2317, %v2389
      %v2402 = vmul.f32 %v2052, %v2388
      %v2403 = vmul.f32 %v2319, %v2389
      %v2404 = vmul.f32 %v2055, %v2388
      %v2405 = vmul.f32 %v2322, %v2389
      %v2406 = vmul.f32 %v2057, %v2388
      %v2407 = vmul.f32 %v2324, %v2389
      %v2408 = vmul.f32 %v2060, %v2388
      %v2409 = vmul.f32 %v2327, %v2389
      %v2410 = vmul.f32 %v2062, %v2388
      %v2411 = vmul.f32 %v2329, %v2389
      %v2412 = vmul.f32 %v2065, %v2388
      %v2413 = vmul.f32 %v2332, %v2389
      %v2414 = vmul.f32 %v2067, %v2388
      %v2415 = vmul.f32 %v2334, %v2389
      %v2416 = vmul.f32 %v2070, %v2388
      %v2417 = vmul.f32 %v2337, %v2389
      %v2418 = vmul.f32 %v2072, %v2388
      %v2419 = vmul.f32 %v2339, %v2389
      %v2420 = vmul.f32 %v2075, %v2388
      %v2421 = vmul.f32 %v2342, %v2389
      %v2422 = vmul.f32 %v2077, %v2388
      %v2423 = vmul.f32 %v2344, %v2389
      %v2424 = vmul.f32 %v2080, %v2388
      %v2425 = vmul.f32 %v2347, %v2389
      %v2426 = vmul.f32 %v2082, %v2388
      %v2427 = vmul.f32 %v2349, %v2389
      %v2428 = vmul.f32 %v2085, %v2388
      %v2429 = vmul.f32 %v2352, %v2389
      %v2430 = vmul.f32 %v2087, %v2388
      %v2431 = vmul.f32 %v2354, %v2389
      %v2432 = vmul.f32 %v2090, %v2388
      %v2433 = vmul.f32 %v2357, %v2389
      %v2434 = vmul.f32 %v2092, %v2388
      %v2435 = vmul.f32 %v2359, %v2389
      %v2436 = vmul.f32 %v2095, %v2388
      %v2437 = vmul.f32 %v2362, %v2389
      %v2438 = vmul.f32 %v2097, %v2388
      %v2439 = vmul.f32 %v2364, %v2389
      %v2440 = vmul.f32 %v2100, %v2388
      %v2441 = vmul.f32 %v2367, %v2389
      %v2442 = vmul.f32 %v2102, %v2388
      %v2443 = vmul.f32 %v2369, %v2389
      %v2444 = vmul.f32 %v2105, %v2388
      %v2445 = vmul.f32 %v2372, %v2389
      %v2446 = vmul.f32 %v2107, %v2388
      %v2447 = vmul.f32 %v2374, %v2389
      %v2448 = vmul.f32 %v2110, %v2388
      %v2449 = vmul.f32 %v2377, %v2389
      %v2450 = vmul.f32 %v2112, %v2388
      %v2451 = vmul.f32 %v2379, %v2389
      %v2452 = vmul.f32 %v2115, %v2388
      %v2453 = vmul.f32 %v2382, %v2389
      %v2454 = vmul.f32 %v2117, %v2388
      %v2455 = vmul.f32 %v2384, %v2389
      %v2456 = vmax.f32 %v2392, %v2393
      %2457 = vmax.xlane.f32.xlu0 %v2456
      %v2458 = vpop.xlane.xlu0 %2457
      %v2459 = vmax.f32 %v2394, %v2395
      %2460 = vmax.xlane.f32.xlu0 %v2459
      %v2461 = vpop.xlane.xlu0 %2460
      %v2462 = vmax.f32 %v2396, %v2397
      %2463 = vmax.xlane.f32.xlu0 %v2462
      %v2464 = vpop.xlane.xlu0 %2463
      %v2465 = vmax.f32 %v2398, %v2399
      %2466 = vmax.xlane.f32.xlu0 %v2465
      %v2467 = vpop.xlane.xlu0 %2466
      %v2468 = vmax.f32 %v2400, %v2401
      %2469 = vmax.xlane.f32.xlu0 %v2468
      %v2470 = vpop.xlane.xlu0 %2469
      %v2471 = vmax.f32 %v2402, %v2403
      %2472 = vmax.xlane.f32.xlu0 %v2471
      %v2473 = vpop.xlane.xlu0 %2472
      %v2474 = vmax.f32 %v2404, %v2405
      %2475 = vmax.xlane.f32.xlu0 %v2474
      %v2476 = vpop.xlane.xlu0 %2475
      %v2477 = vmax.f32 %v2406, %v2407
      %2478 = vmax.xlane.f32.xlu0 %v2477
      %v2479 = vpop.xlane.xlu0 %2478
      %v2480 = vmax.f32 %v2408, %v2409
      %2481 = vmax.xlane.f32.xlu0 %v2480
      %v2482 = vpop.xlane.xlu0 %2481
      %v2483 = vmax.f32 %v2410, %v2411
      %2484 = vmax.xlane.f32.xlu0 %v2483
      %v2485 = vpop.xlane.xlu0 %2484
      %v2486 = vmax.f32 %v2412, %v2413
      %2487 = vmax.xlane.f32.xlu0 %v2486
      %v2488 = vpop.xlane.xlu0 %2487
      %v2489 = vmax.f32 %v2414, %v2415
      %2490 = vmax.xlane.f32.xlu0 %v2489
      %v2491 = vpop.xlane.xlu0 %2490
      %v2492 = vmax.f32 %v2416, %v2417
      %2493 = vmax.xlane.f32.xlu0 %v2492
      %v2494 = vpop.xlane.xlu0 %2493
      %v2495 = vmax.f32 %v2418, %v2419
      %2496 = vmax.xlane.f32.xlu0 %v2495
      %v2497 = vpop.xlane.xlu0 %2496
      %v2498 = vmax.f32 %v2420, %v2421
      %2499 = vmax.xlane.f32.xlu0 %v2498
      %v2500 = vpop.xlane.xlu0 %2499
      %v2501 = vmax.f32 %v2422, %v2423
      %2502 = vmax.xlane.f32.xlu0 %v2501
      %v2503 = vpop.xlane.xlu0 %2502
      %v2504 = vmax.f32 %v2424, %v2425
      %2505 = vmax.xlane.f32.xlu0 %v2504
      %v2506 = vpop.xlane.xlu0 %2505
      %v2507 = vmax.f32 %v2426, %v2427
      %2508 = vmax.xlane.f32.xlu0 %v2507
      %v2509 = vpop.xlane.xlu0 %2508
      %v2510 = vmax.f32 %v2428, %v2429
      %2511 = vmax.xlane.f32.xlu0 %v2510
      %v2512 = vpop.xlane.xlu0 %2511
      %v2513 = vmax.f32 %v2430, %v2431
      %2514 = vmax.xlane.f32.xlu0 %v2513
      %v2515 = vpop.xlane.xlu0 %2514
      %v2516 = vmax.f32 %v2432, %v2433
      %2517 = vmax.xlane.f32.xlu0 %v2516
      %v2518 = vpop.xlane.xlu0 %2517
      %v2519 = vmax.f32 %v2434, %v2435
      %2520 = vmax.xlane.f32.xlu0 %v2519
      %v2521 = vpop.xlane.xlu0 %2520
      %v2522 = vmax.f32 %v2436, %v2437
      %2523 = vmax.xlane.f32.xlu0 %v2522
      %v2524 = vpop.xlane.xlu0 %2523
      %v2525 = vmax.f32 %v2438, %v2439
      %2526 = vmax.xlane.f32.xlu0 %v2525
      %v2527 = vpop.xlane.xlu0 %2526
      %v2528 = vmax.f32 %v2440, %v2441
      %2529 = vmax.xlane.f32.xlu0 %v2528
      %v2530 = vpop.xlane.xlu0 %2529
      %v2531 = vmax.f32 %v2442, %v2443
      %2532 = vmax.xlane.f32.xlu0 %v2531
      %v2533 = vpop.xlane.xlu0 %2532
      %v2534 = vmax.f32 %v2444, %v2445
      %2535 = vmax.xlane.f32.xlu0 %v2534
      %v2536 = vpop.xlane.xlu0 %2535
      %v2537 = vmax.f32 %v2446, %v2447
      %2538 = vmax.xlane.f32.xlu0 %v2537
      %v2539 = vpop.xlane.xlu0 %2538
      %v2540 = vmax.f32 %v2448, %v2449
      %2541 = vmax.xlane.f32.xlu0 %v2540
      %v2542 = vpop.xlane.xlu0 %2541
      %v2543 = vmax.f32 %v2450, %v2451
      %2544 = vmax.xlane.f32.xlu0 %v2543
      %v2545 = vpop.xlane.xlu0 %2544
      %v2546 = vmax.f32 %v2452, %v2453
      %2547 = vmax.xlane.f32.xlu0 %v2546
      %v2548 = vpop.xlane.xlu0 %2547
      %v2549 = vmax.f32 %v2454, %v2455
      %2550 = vmax.xlane.f32.xlu0 %v2549
      %v2551 = vpop.xlane.xlu0 %2550
      %v2552 = vsub.f32 %v2392, %v2458
      %v2553 = vsub.f32 %v2393, %v2458
      %v2554 = vsub.f32 %v2394, %v2461
      %v2555 = vsub.f32 %v2395, %v2461
      %v2556 = vsub.f32 %v2396, %v2464
      %v2557 = vsub.f32 %v2397, %v2464
      %v2558 = vsub.f32 %v2398, %v2467
      %v2559 = vsub.f32 %v2399, %v2467
      %v2560 = vsub.f32 %v2400, %v2470
      %v2561 = vsub.f32 %v2401, %v2470
      %v2562 = vsub.f32 %v2402, %v2473
      %v2563 = vsub.f32 %v2403, %v2473
      %v2564 = vsub.f32 %v2404, %v2476
      %v2565 = vsub.f32 %v2405, %v2476
      %v2566 = vsub.f32 %v2406, %v2479
      %v2567 = vsub.f32 %v2407, %v2479
      %v2568 = vsub.f32 %v2408, %v2482
      %v2569 = vsub.f32 %v2409, %v2482
      %v2570 = vsub.f32 %v2410, %v2485
      %v2571 = vsub.f32 %v2411, %v2485
      %v2572 = vsub.f32 %v2412, %v2488
      %v2573 = vsub.f32 %v2413, %v2488
      %v2574 = vsub.f32 %v2414, %v2491
      %v2575 = vsub.f32 %v2415, %v2491
      %v2576 = vsub.f32 %v2416, %v2494
      %v2577 = vsub.f32 %v2417, %v2494
      %v2578 = vsub.f32 %v2418, %v2497
      %v2579 = vsub.f32 %v2419, %v2497
      %v2580 = vsub.f32 %v2420, %v2500
      %v2581 = vsub.f32 %v2421, %v2500
      %v2582 = vsub.f32 %v2422, %v2503
      %v2583 = vsub.f32 %v2423, %v2503
      %v2584 = vsub.f32 %v2424, %v2506
      %v2585 = vsub.f32 %v2425, %v2506
      %v2586 = vsub.f32 %v2426, %v2509
      %v2587 = vsub.f32 %v2427, %v2509
      %v2588 = vsub.f32 %v2428, %v2512
      %v2589 = vsub.f32 %v2429, %v2512
      %v2590 = vsub.f32 %v2430, %v2515
      %v2591 = vsub.f32 %v2431, %v2515
      %v2592 = vsub.f32 %v2432, %v2518
      %v2593 = vsub.f32 %v2433, %v2518
      %v2594 = vsub.f32 %v2434, %v2521
      %v2595 = vsub.f32 %v2435, %v2521
      %v2596 = vsub.f32 %v2436, %v2524
      %v2597 = vsub.f32 %v2437, %v2524
      %v2598 = vsub.f32 %v2438, %v2527
      %v2599 = vsub.f32 %v2439, %v2527
      %v2600 = vsub.f32 %v2440, %v2530
      %v2601 = vsub.f32 %v2441, %v2530
      %v2602 = vsub.f32 %v2442, %v2533
      %v2603 = vsub.f32 %v2443, %v2533
      %v2604 = vsub.f32 %v2444, %v2536
      %v2605 = vsub.f32 %v2445, %v2536
      %v2606 = vsub.f32 %v2446, %v2539
      %v2607 = vsub.f32 %v2447, %v2539
      %v2608 = vsub.f32 %v2448, %v2542
      %v2609 = vsub.f32 %v2449, %v2542
      %v2610 = vsub.f32 %v2450, %v2545
      %v2611 = vsub.f32 %v2451, %v2545
      %v2612 = vsub.f32 %v2452, %v2548
      %v2613 = vsub.f32 %v2453, %v2548
      %v2614 = vsub.f32 %v2454, %v2551
      %v2615 = vsub.f32 %v2455, %v2551
      %v2616 = vmul.f32 %v2552, 1.442695
      %v2617 = vpow.pop %v2616
      %v2618 = vmul.f32 %v2553, 1.442695
      %v2619 = vpow.pop %v2618
      %v2620 = vmul.f32 %v2554, 1.442695
      %v2621 = vpow.pop %v2620
      %v2622 = vmul.f32 %v2555, 1.442695
      %v2623 = vpow.pop %v2622
      %v2624 = vmul.f32 %v2556, 1.442695
      %v2625 = vpow.pop %v2624
      %v2626 = vmul.f32 %v2557, 1.442695
      %v2627 = vpow.pop %v2626
      %v2628 = vmul.f32 %v2558, 1.442695
      %v2629 = vpow.pop %v2628
      %v2630 = vmul.f32 %v2559, 1.442695
      %v2631 = vpow.pop %v2630
      %v2632 = vmul.f32 %v2560, 1.442695
      %v2633 = vpow.pop %v2632
      %v2634 = vmul.f32 %v2561, 1.442695
      %v2635 = vpow.pop %v2634
      %v2636 = vmul.f32 %v2562, 1.442695
      %v2637 = vpow.pop %v2636
      %v2638 = vmul.f32 %v2563, 1.442695
      %v2639 = vpow.pop %v2638
      %v2640 = vmul.f32 %v2564, 1.442695
      %v2641 = vpow.pop %v2640
      %v2642 = vmul.f32 %v2565, 1.442695
      %v2643 = vpow.pop %v2642
      %v2644 = vmul.f32 %v2566, 1.442695
      %v2645 = vpow.pop %v2644
      %v2646 = vmul.f32 %v2567, 1.442695
      %v2647 = vpow.pop %v2646
      %v2648 = vmul.f32 %v2568, 1.442695
      %v2649 = vpow.pop %v2648
      %v2650 = vmul.f32 %v2569, 1.442695
      %v2651 = vpow.pop %v2650
      %v2652 = vmul.f32 %v2570, 1.442695
      %v2653 = vpow.pop %v2652
      %v2654 = vmul.f32 %v2571, 1.442695
      %v2655 = vpow.pop %v2654
      %v2656 = vmul.f32 %v2572, 1.442695
      %v2657 = vpow.pop %v2656
      %v2658 = vmul.f32 %v2573, 1.442695
      %v2659 = vpow.pop %v2658
      %v2660 = vmul.f32 %v2574, 1.442695
      %v2661 = vpow.pop %v2660
      %v2662 = vmul.f32 %v2575, 1.442695
      %v2663 = vpow.pop %v2662
      %v2664 = vmul.f32 %v2576, 1.442695
      %v2665 = vpow.pop %v2664
      %v2666 = vmul.f32 %v2577, 1.442695
      %v2667 = vpow.pop %v2666
      %v2668 = vmul.f32 %v2578, 1.442695
      %v2669 = vpow.pop %v2668
      %v2670 = vmul.f32 %v2579, 1.442695
      %v2671 = vpow.pop %v2670
      %v2672 = vmul.f32 %v2580, 1.442695
      %v2673 = vpow.pop %v2672
      %v2674 = vmul.f32 %v2581, 1.442695
      %v2675 = vpow.pop %v2674
      %v2676 = vmul.f32 %v2582, 1.442695
      %v2677 = vpow.pop %v2676
      %v2678 = vmul.f32 %v2583, 1.442695
      %v2679 = vpow.pop %v2678
      %v2680 = vmul.f32 %v2584, 1.442695
      %v2681 = vpow.pop %v2680
      %v2682 = vmul.f32 %v2585, 1.442695
      %v2683 = vpow.pop %v2682
      %v2684 = vmul.f32 %v2586, 1.442695
      %v2685 = vpow.pop %v2684
      %v2686 = vmul.f32 %v2587, 1.442695
      %v2687 = vpow.pop %v2686
      %v2688 = vmul.f32 %v2588, 1.442695
      %v2689 = vpow.pop %v2688
      %v2690 = vmul.f32 %v2589, 1.442695
      %v2691 = vpow.pop %v2690
      %v2692 = vmul.f32 %v2590, 1.442695
      %v2693 = vpow.pop %v2692
      %v2694 = vmul.f32 %v2591, 1.442695
      %v2695 = vpow.pop %v2694
      %v2696 = vmul.f32 %v2592, 1.442695
      %v2697 = vpow.pop %v2696
      %v2698 = vmul.f32 %v2593, 1.442695
      %v2699 = vpow.pop %v2698
      %v2700 = vmul.f32 %v2594, 1.442695
      %v2701 = vpow.pop %v2700
      %v2702 = vmul.f32 %v2595, 1.442695
      %v2703 = vpow.pop %v2702
      %v2704 = vmul.f32 %v2596, 1.442695
      %v2705 = vpow.pop %v2704
      %v2706 = vmul.f32 %v2597, 1.442695
      %v2707 = vpow.pop %v2706
      %v2708 = vmul.f32 %v2598, 1.442695
      %v2709 = vpow.pop %v2708
      %v2710 = vmul.f32 %v2599, 1.442695
      %v2711 = vpow.pop %v2710
      %v2712 = vmul.f32 %v2600, 1.442695
      %v2713 = vpow.pop %v2712
      %v2714 = vmul.f32 %v2601, 1.442695
      %v2715 = vpow.pop %v2714
      %v2716 = vmul.f32 %v2602, 1.442695
      %v2717 = vpow.pop %v2716
      %v2718 = vmul.f32 %v2603, 1.442695
      %v2719 = vpow.pop %v2718
      %v2720 = vmul.f32 %v2604, 1.442695
      %v2721 = vpow.pop %v2720
      %v2722 = vmul.f32 %v2605, 1.442695
      %v2723 = vpow.pop %v2722
      %v2724 = vmul.f32 %v2606, 1.442695
      %v2725 = vpow.pop %v2724
      %v2726 = vmul.f32 %v2607, 1.442695
      %v2727 = vpow.pop %v2726
      %v2728 = vmul.f32 %v2608, 1.442695
      %v2729 = vpow.pop %v2728
      %v2730 = vmul.f32 %v2609, 1.442695
      %v2731 = vpow.pop %v2730
      %v2732 = vmul.f32 %v2610, 1.442695
      %v2733 = vpow.pop %v2732
      %v2734 = vmul.f32 %v2611, 1.442695
      %v2735 = vpow.pop %v2734
      %v2736 = vmul.f32 %v2612, 1.442695
      %v2737 = vpow.pop %v2736
      %v2738 = vmul.f32 %v2613, 1.442695
      %v2739 = vpow.pop %v2738
      %v2740 = vmul.f32 %v2614, 1.442695
      %v2741 = vpow.pop %v2740
      %v2742 = vmul.f32 %v2615, 1.442695
      %v2743 = vpow.pop %v2742
      %v2745 = vperm.slane %v247, 0
      %v2746 = vperm.slane %v247, 1
      %v2749 = vmul.f32 %v239, %v2745
      %v2750 = vmul.f32 %v240, %v2746
      %v2751 = vmul.f32 %v241, %v2745
      %v2752 = vmul.f32 %v242, %v2746
      %v2753 = vmul.f32 %v243, %v2745
      %v2754 = vmul.f32 %v244, %v2746
      %v2755 = vmul.f32 %v245, %v2745
      %v2756 = vmul.f32 %v246, %v2746
      %v2757 = vpack.c.bf16 %v2751, %v2749
      %v2758 = vpack.c.bf16 %v2752, %v2750
      %v2759 = vpack.c.bf16 %v2755, %v2753
      %v2760 = vpack.c.bf16 %v2756, %v2754
      %v2761 = vpack.c.bf16 1.0, 1.0
      %v2762 = vpack.c.bf16 %v2621, %v2617
      %v2763 = vpack.c.bf16 %v2623, %v2619
      %v2764 = vpack.c.bf16 %v2629, %v2625
      %v2765 = vpack.c.bf16 %v2631, %v2627
      %v2766 = vpack.c.bf16 %v2637, %v2633
      %v2767 = vpack.c.bf16 %v2639, %v2635
      %v2768 = vpack.c.bf16 %v2645, %v2641
      %v2769 = vpack.c.bf16 %v2647, %v2643
      %v2770 = vpack.c.bf16 %v2653, %v2649
      %v2771 = vpack.c.bf16 %v2655, %v2651
      %v2772 = vpack.c.bf16 %v2661, %v2657
      %v2773 = vpack.c.bf16 %v2663, %v2659
      %v2774 = vpack.c.bf16 %v2669, %v2665
      %v2775 = vpack.c.bf16 %v2671, %v2667
      %v2776 = vpack.c.bf16 %v2677, %v2673
      %v2777 = vpack.c.bf16 %v2679, %v2675
      %v2778 = vpack.c.bf16 %v2685, %v2681
      %v2779 = vpack.c.bf16 %v2687, %v2683
      %v2780 = vpack.c.bf16 %v2693, %v2689
      %v2781 = vpack.c.bf16 %v2695, %v2691
      %v2782 = vpack.c.bf16 %v2701, %v2697
      %v2783 = vpack.c.bf16 %v2703, %v2699
      %v2784 = vpack.c.bf16 %v2709, %v2705
      %v2785 = vpack.c.bf16 %v2711, %v2707
      %v2786 = vpack.c.bf16 %v2717, %v2713
      %v2787 = vpack.c.bf16 %v2719, %v2715
      %v2788 = vpack.c.bf16 %v2725, %v2721
      %v2789 = vpack.c.bf16 %v2727, %v2723
      %v2790 = vpack.c.bf16 %v2733, %v2729
      %v2791 = vpack.c.bf16 %v2735, %v2731
      %v2792 = vpack.c.bf16 %v2741, %v2737
      %v2793 = vpack.c.bf16 %v2743, %v2739
      %2794 = vmatpush.bf16.xpose.msra.mxu0 %v2776
      %2795 = vmatpush.bf16.xpose.msra.mxu0 %v2774
      %2796 = vmatpush.bf16.xpose.msra.mxu0 %v2772
      %2797 = vmatpush.bf16.xpose.msra.mxu0 %v2770
      %2798 = vmatpush.bf16.xpose.msra.mxu0 %v2768
      %2799 = vmatpush.bf16.xpose.msra.mxu0 %v2766
      %2800 = vmatpush.bf16.xpose.msra.mxu0 %v2764
      %2801 = vmatpush.bf16.xpose.msra.mxu0 %v2762
      %2802 = vmatmul.bf16.gmra.mxu0 %v2757
      %v2803 = vpop.f32.mrf.mxu0
      %v2804 = vadd.f32 0.0, %v2803
      %v2805 = vpop.f32.mrf.mxu0
      %v2806 = vadd.f32 0.0, %v2805
      %2807 = vmatmul.bf16.gmra.mxu0 %v2759
      %v2808 = vpop.f32.mrf.mxu0
      %v2809 = vadd.f32 0.0, %v2808
      %v2810 = vpop.f32.mrf.mxu0
      %v2811 = vadd.f32 0.0, %v2810
      %2812 = vmatmul.bf16.gmra.mxu0 %v2761
      %v2813 = vpop.f32.mrf.mxu0
      %v2814 = vadd.f32 0.0, %v2813
      %v2815 = vpop.f32.mrf.mxu0
      %2816 = vdwg.mxu0
      %2817 = vmatpush.bf16.xpose.msra.mxu0 %v2777
      %2818 = vmatpush.bf16.xpose.msra.mxu0 %v2775
      %2819 = vmatpush.bf16.xpose.msra.mxu0 %v2773
      %2820 = vmatpush.bf16.xpose.msra.mxu0 %v2771
      %2821 = vmatpush.bf16.xpose.msra.mxu0 %v2769
      %2822 = vmatpush.bf16.xpose.msra.mxu0 %v2767
      %2823 = vmatpush.bf16.xpose.msra.mxu0 %v2765
      %2824 = vmatpush.bf16.xpose.msra.mxu0 %v2763
      %2825 = vmatmul.bf16.gmra.mxu0 %v2758
      %v2826 = vpop.f32.mrf.mxu0
      %v2827 = vadd.f32 %v2804, %v2826
      %v2828 = vpop.f32.mrf.mxu0
      %v2829 = vadd.f32 %v2806, %v2828
      %2830 = vmatmul.bf16.gmra.mxu0 %v2760
      %v2831 = vpop.f32.mrf.mxu0
      %v2832 = vadd.f32 %v2809, %v2831
      %v2833 = vpop.f32.mrf.mxu0
      %v2834 = vadd.f32 %v2811, %v2833
      %2835 = vmatmul.bf16.gmra.mxu0 %v2761
      %v2836 = vpop.f32.mrf.mxu0
      %v2837 = vadd.f32 %v2814, %v2836
      %v2838 = vpop.f32.mrf.mxu0
      %2839 = vdwg.mxu0
      %2840 = vmatpush.bf16.xpose.msra.mxu0 %v2792
      %2841 = vmatpush.bf16.xpose.msra.mxu0 %v2790
      %2842 = vmatpush.bf16.xpose.msra.mxu0 %v2788
      %2843 = vmatpush.bf16.xpose.msra.mxu0 %v2786
      %2844 = vmatpush.bf16.xpose.msra.mxu0 %v2784
      %2845 = vmatpush.bf16.xpose.msra.mxu0 %v2782
      %2846 = vmatpush.bf16.xpose.msra.mxu0 %v2780
      %2847 = vmatpush.bf16.xpose.msra.mxu0 %v2778
      %2848 = vmatmul.bf16.gmra.mxu0 %v2757
      %v2849 = vpop.f32.mrf.mxu0
      %v2850 = vadd.f32 0.0, %v2849
      %v2851 = vpop.f32.mrf.mxu0
      %v2852 = vadd.f32 0.0, %v2851
      %2853 = vmatmul.bf16.gmra.mxu0 %v2759
      %v2854 = vpop.f32.mrf.mxu0
      %v2855 = vadd.f32 0.0, %v2854
      %v2856 = vpop.f32.mrf.mxu0
      %v2857 = vadd.f32 0.0, %v2856
      %2858 = vmatmul.bf16.gmra.mxu0 %v2761
      %v2859 = vpop.f32.mrf.mxu0
      %v2860 = vadd.f32 0.0, %v2859
      %v2861 = vpop.f32.mrf.mxu0
      %2862 = vdwg.mxu0
      %2863 = vmatpush.bf16.xpose.msra.mxu0 %v2793
      %2864 = vmatpush.bf16.xpose.msra.mxu0 %v2791
      %2865 = vmatpush.bf16.xpose.msra.mxu0 %v2789
      %2866 = vmatpush.bf16.xpose.msra.mxu0 %v2787
      %2867 = vmatpush.bf16.xpose.msra.mxu0 %v2785
      %2868 = vmatpush.bf16.xpose.msra.mxu0 %v2783
      %2869 = vmatpush.bf16.xpose.msra.mxu0 %v2781
      %2870 = vmatpush.bf16.xpose.msra.mxu0 %v2779
      %2871 = vmatmul.bf16.gmra.mxu0 %v2758
      %v2872 = vpop.f32.mrf.mxu0
      %v2873 = vadd.f32 %v2850, %v2872
      %v2874 = vpop.f32.mrf.mxu0
      %v2875 = vadd.f32 %v2852, %v2874
      %2876 = vmatmul.bf16.gmra.mxu0 %v2760
      %v2877 = vpop.f32.mrf.mxu0
      %v2878 = vadd.f32 %v2855, %v2877
      %v2879 = vpop.f32.mrf.mxu0
      %v2880 = vadd.f32 %v2857, %v2879
      %2881 = vmatmul.bf16.gmra.mxu0 %v2761
      %v2882 = vpop.f32.mrf.mxu0
      %v2883 = vadd.f32 %v2860, %v2882
      %v2884 = vpop.f32.mrf.mxu0
      %2885 = vdwg.mxu0
      %v2886 = vrcp.pop %v2837
      %v2887 = vrcp.pop %v2883
      %v2888 = vperm.slane %v2886, 0
      %v2889 = vperm.slane %v2887, 0
      %v2890 = vmul.f32 %v2827, %v2888
      %v2891 = vmul.f32 %v2873, %v2889
      %v2892 = vmul.f32 %v2829, %v2888
      %v2893 = vmul.f32 %v2875, %v2889
      %v2894 = vmul.f32 %v2832, %v2888
      %v2895 = vmul.f32 %v2878, %v2889
      %v2896 = vmul.f32 %v2834, %v2888
      %v2897 = vmul.f32 %v2880, %v2889
      %2898 = vst [vmem:[%s197 + $0x80] sm:$0xff] %v2890
      %2899 = vst [vmem:[%s197 + $0x88] sm:$0xff] %v2891
      %2900 = vst [vmem:[%s197 + $0x90] sm:$0xff] %v2892
      %2901 = vst [vmem:[%s197 + $0x98] sm:$0xff] %v2893
      %2902 = vst [vmem:[%s197 + $0xa0] sm:$0xff] %v2894
      %2903 = vst [vmem:[%s197 + $0xa8] sm:$0xff] %v2895
      %2904 = vst [vmem:[%s197 + $0xb0] sm:$0xff] %v2896
      %2905 = vst [vmem:[%s197 + $0xb8] sm:$0xff] %v2897
      %p2906 = scmp.lt.s32.totalorder %s15, 1
      %s2907 = scalar_select %p2906, %s15, 1
      %s2908 = smul.addr %s2907, 24
      %s2909 = smul.addr %s2908, 8
      %s2910 = scalar_lea.vmem %s4, %s2909
      // Predicated region
      $region37: #{patch_soft_shift_forward.1} parent=35 // pred_check
        %p2911 = pneg %p122
      $region38: #{patch_soft_shift_forward.1} parent=35 // pred_check_branch
        %2913 = sbr.rel (%p2911) target = $region40
      $region39: #{patch_soft_shift_forward.1} parent=35 // pred_region
        _
      $region40: #{patch_soft_shift_forward.1} parent=35 // pred_fallthru
        _
    $region36: #{patch_soft_shift_forward.1} parent=5 // pred_fallthru
      _
    %p2914 = scmp.le.s32.totalorder 2, %s10
    // Predicated region
    $region41: #{patch_soft_shift_forward.1} parent=5 // pred_check
      %p2915 = pneg %p2914
    $region42: #{patch_soft_shift_forward.1} parent=5 // pred_check_branch
      %2917 = sbr.rel (%p2915) target = $region44
    $region43: #{patch_soft_shift_forward.1} parent=5 // pred_region
      %s2918 = ssub.s32 %s10, 2
      // Predicated region
      $region45: #{patch_soft_shift_forward.1} parent=43 // pred_check
        %p2919 = pneg %p128
      $region46: #{patch_soft_shift_forward.1} parent=43 // pred_check_branch
        %2921 = sbr.rel (%p2919) target = $region48
      $region47: #{patch_soft_shift_forward.1} parent=43 // pred_region
        %p2922 = scmp.lt.s32.totalorder %s16, 1
        %s2923 = scalar_select %p2922, %s16, 1
        %s2924 = smul.addr %s2923, 24
        %s2925 = smul.addr %s2924, 8
        %s2926 = scalar_lea.vmem %s4, %s2925
      $region48: #{patch_soft_shift_forward.1} parent=43 // pred_fallthru
        _
    $region44: #{patch_soft_shift_forward.1} parent=5 // pred_fallthru
      _
  $region6: #{patch_soft_shift_forward.1} parent=0 // loop_footer
    %s14 = sadd.s32 1, %s10
  $region7: #{patch_soft_shift_forward.1} parent=0 // loop_footer_branch
    %9 = sbr.rel target = $region3
  $region8: #{patch_soft_shift_forward.1} parent=0 // loop_exit
    _

</llo_original>
